<compile_context>
chip_gen: v6e
topology: v6e:2x2x1
jax: 0.10.0
libtpu: 0.0.40
codegen_flags: <defaults>
</compile_context>

<pallas_src>
import functools

import jax
import jax.numpy as jnp
from jax.experimental import pallas as pl
from jax.experimental.pallas import tpu as pltpu


def _round_up(x, m):
    return (x + m - 1) // m * m


def _pick_tile_l(seq_len, cap=32):
    """Time-steps per block: largest divisor of L not exceeding `cap`.

    tile_L sits on an outer block dim (no (8,128) constraint); the cap only
    bounds the unrolled in-kernel relayout loop and the per-block VMEM footprint
    (matters under v7x's 64 MiB VMEM when V is padded to 256).
    """
    if seq_len <= cap:
        return seq_len
    for d in range(cap, 0, -1):
        if seq_len % d == 0:
            return d
    return 1


def _fused_gcn_kernel(x_ref, a_ref, w_ref, b_ref, o_ref, *, n_powers, mm_dtype):
    """Fused graph diffusion + 1x1 conv for one (sample, time-tile) block.

    x_ref: (tile_L, C_pad, V_pad)     time-major input block, nodes on lanes
    a_ref: (n_powers, V_pad, V_pad)   precomputed adjacency powers (resident)
    w_ref: (C_out, P*C_pad)           1x1-conv weight, piece-major cols (resident)
    b_ref: (C_out, 1)                 bias (resident)
    o_ref: (C_out, tile_L*V_pad)      output block, (time, node) merged on lanes
    """
    tl, C, V = x_ref.shape

    # (tile_L, C_pad, V_pad) -> (tile_L*C_pad, V_pad): merging leading dims with
    # C_pad % 8 == 0 is a pure vreg re-indexing (layout no-op).
    x_rows = x_ref[...].reshape(tl * C, V)
    xm = x_rows.astype(mm_dtype)

    # ---- graph diffusion: one independent MXU matmul per adjacency power -----
    piece_rows = [x_rows]                          # identity piece (torch: out=[x])
    for p in range(n_powers):                      # static Python loop
        a = a_ref[p].astype(mm_dtype)              # (V_pad, V_pad)
        piece_rows.append(jnp.dot(xm, a, preferred_element_type=jnp.float32))

    # ---- relayout rows=(l,c), lanes=v  ->  rows=(piece,c), lanes=(l,v) --------
    # Aligned row-block slices + concats only (no minor-dim reshape, no rank-3
    # dot_general): every slab is whole (8,128) vregs, the data moved per grid
    # step is a few hundred KiB of VMEM at most.
    slabs = []
    for pr in piece_rows:
        slabs.append(jnp.concatenate(
            [pr[l * C:(l + 1) * C, :] for l in range(tl)], axis=1))  # (C_pad, tl*V)
    h2 = jnp.concatenate(slabs, axis=0)            # (P*C_pad, tl*V)

    # ---- fused 1x1 conv: ONE contraction over P*C_pad, bias once, one store ---
    # (For very large tiles on v7x, switch to per-piece accumulation
    #  y += w_ref[:, p*C:(p+1)*C] @ slab_p to avoid materializing h2.)
    y = jnp.dot(w_ref[...].astype(mm_dtype), h2.astype(mm_dtype),
                preferred_element_type=jnp.float32)                  # (C_out, tl*V)
    o_ref[...] = (y + b_ref[...]).astype(o_ref.dtype)


def graph_conv_net(x, supports, w, b, *, order=2, matmul_dtype=jnp.bfloat16):
    """Forward pass of GraphConvNet.

    x:        (N, C_in, V, L)  float32 (NCHW; H = nodes V, W = time L)
    supports: list of (V, V) adjacency matrices
    w:        (C_out, C_total) with C_total = (order*len(supports)+1)*C_in
              (columns in torch.cat(dim=1) order: piece-major, channel-minor)
    b:        (C_out,)
    returns:  (N, C_out, V, L)
    """
    N, C, V, L = x.shape
    S = len(supports)
    assert S >= 1 and order >= 1
    P = order * S + 1
    C_total = P * C
    C_out = w.shape[0]
    assert w.shape == (C_out, C_total)
    assert b.shape == (C_out,)

    V_pad = _round_up(V, 128)      # lane-dense loads/stores + full MXU tiles
    C_pad = _round_up(C, 8)        # sublane-aligned channel blocks
    tile_l = _pick_tile_l(L)
    n_l_tiles = L // tile_l

    # --- layout prep (one fused XLA copy in, one out) --------------------------
    # Nodes go to the lane axis; the pad to V_pad forces the copy, the transpose
    # rides along for free inside the same fusion.
    x_t = jnp.transpose(x, (0, 3, 1, 2))                     # (N, L, C, V)
    x_p = jnp.pad(x_t, ((0, 0), (0, 0), (0, C_pad - C), (0, V_pad - V)))

    # Precompute adjacency powers A, A^2, ..., A^order per support (opt: removes
    # the serial xk = xk @ a dependency chain from the hot loop).
    power_mats = []
    for a in supports:
        ak = a
        power_mats.append(ak)
        for _ in range(2, order + 1):
            ak = ak @ a
            power_mats.append(ak)
    a_stack = jnp.stack(power_mats, axis=0)                  # (S*order, V, V)
    a_stack = jnp.pad(a_stack, ((0, 0), (0, V_pad - V), (0, V_pad - V)))

    # Weight columns stay piece-major / channel-minor (torch.cat(dim=1) order),
    # with the channel axis zero-padded to C_pad (padded channels contribute 0).
    w_p = jnp.pad(w.reshape(C_out, P, C), ((0, 0), (0, 0), (0, C_pad - C)))
    w_p = w_p.reshape(C_out, P * C_pad)
    b_col = b.reshape(C_out, 1)

    kernel = functools.partial(_fused_gcn_kernel, n_powers=S * order,
                               mm_dtype=matmul_dtype)

    out2 = pl.pallas_call(
        kernel,
        out_shape=jax.ShapeDtypeStruct((N, C_out, L * V_pad), x.dtype),
        grid=(N, n_l_tiles),
        in_specs=[
            # per-block input: (tile_L, C_pad, V_pad)
            pl.BlockSpec((None, tile_l, C_pad, V_pad), lambda n, j: (n, j, 0, 0)),
            # grid-invariant operands: constant index_map -> stay VMEM resident
            # (Buffered(1) would halve their footprint; only matters on v7x once
            #  V is padded to 256 and tile_L is large).
            pl.BlockSpec((S * order, V_pad, V_pad), lambda n, j: (0, 0, 0)),
            pl.BlockSpec((C_out, P * C_pad), lambda n, j: (0, 0)),
            pl.BlockSpec((C_out, 1), lambda n, j: (0, 0)),
        ],
        out_specs=pl.BlockSpec((None, C_out, tile_l * V_pad),
                               lambda n, j: (n, 0, j)),
        compiler_params=pltpu.CompilerParams(
            dimension_semantics=("parallel", "parallel"),
            vmem_limit_bytes=32 * 1024 * 1024),
    )(x_p, a_stack, w_p, b_col)

    out = out2.reshape(N, C_out, L, V_pad)[..., :V]          # crop node padding
    return jnp.transpose(out, (0, 1, 3, 2))                  # (N, C_out, V, L)


# ----------------------------------------------------------------------------
# Pure-JAX reference (mirrors the PyTorch forward exactly) for verification.
# ----------------------------------------------------------------------------
def reference(x, supports, w, b, order=2):
    hp = jax.lax.Precision.HIGHEST
    out = [x]
    for a in supports:
        x1 = jnp.einsum("ncvl,vw->ncwl", x, a, precision=hp)
        out.append(x1)
        for _ in range(2, order + 1):
            x1 = jnp.einsum("ncvl,vw->ncwl", x1, a, precision=hp)
            out.append(x1)
    h = jnp.concatenate(out, axis=1)
    y = jnp.einsum("oc,ncvl->novl", w, h, precision=hp)
    return y + b.reshape(1, -1, 1, 1)


if __name__ == "__main__":
    key = jax.random.PRNGKey(0)
    k_x, k_s, k_w, k_b = jax.random.split(key, 4)

    # small shapes consistent with the module: batch=2, c_in=4, nodes=16, seq=8
    N, C_in, V, L = 2, 4, 16, 8
    C_out, support_len, order = 8, 3, 2
    C_total = (order * support_len + 1) * C_in               # 28

    x = jax.random.normal(k_x, (N, C_in, V, L), jnp.float32)
    supports = [
        jax.nn.softmax(
            jax.random.normal(jax.random.fold_in(k_s, i), (V, V), jnp.float32),
            axis=-1)
        for i in range(support_len)
    ]
    # synthetic Conv2d(1x1) parameters: weight (C_out, C_total), bias (C_out,)
    w = 0.1 * jax.random.normal(k_w, (C_out, C_total), jnp.float32)
    b = 0.1 * jax.random.normal(k_b, (C_out,), jnp.float32)

    y_ref = reference(x, supports, w, b, order=order)

    # 1) f32 MXU operands: validates the algorithm / relayout at tight tolerance.
    y_f32 = jax.block_until_ready(
        graph_conv_net(x, supports, w, b, order=order, matmul_dtype=jnp.float32))
    assert y_f32.shape == (N, C_out, V, L), y_f32.shape
    err_f32 = float(jnp.max(jnp.abs(y_f32 - y_ref)))
    assert jnp.allclose(y_f32, y_ref, rtol=2e-3, atol=2e-3), (
        f"f32 max abs err = {err_f32}")

    # 2) bf16 MXU operands, f32 accumulation (production config on v5e/v6e/v7x):
    #    tolerance loosened for bf16 operand quantization, as flagged in review.
    y_bf16 = jax.block_until_ready(
        graph_conv_net(x, supports, w, b, order=order, matmul_dtype=jnp.bfloat16))
    assert y_bf16.shape == (N, C_out, V, L), y_bf16.shape
    err_bf16 = float(jnp.max(jnp.abs(y_bf16 - y_ref)))
    assert jnp.allclose(y_bf16, y_ref, rtol=2e-2, atol=3e-2), (
        f"bf16 max abs err = {err_bf16}")

    print("KERNEL_OK")
</pallas_src>

<mosaic_0001>
module attributes {stable_mosaic.version = 11 : i64} {
  func.func @_fused_gcn_kernel(%arg0: i32, %arg1: i32, %arg2: memref<1x8x8x128xf32, #tpu.memory_space<vmem>>, %arg3: memref<6x128x128xf32, #tpu.memory_space<vmem>>, %arg4: memref<8x56xf32, #tpu.memory_space<vmem>>, %arg5: memref<8x1xf32, #tpu.memory_space<vmem>>, %arg6: memref<1x8x1024xf32, #tpu.memory_space<vmem>>) attributes {dimension_semantics = [#tpu.dimension_semantics<parallel>, #tpu.dimension_semantics<parallel>], iteration_bounds = array<i64: 2, 1>, scalar_prefetch = 0 : i64, scratch_operands = 0 : i64, tpu.core_type = #tpu.core_type<tc>, window_params = [{transform_indices = @transform_0, window_bounds = array<i64: 1, 8, 8, 128>}, {pipeline_mode = #tpu.pipeline_mode<synchronous>, transform_indices = @transform_1, window_bounds = array<i64: 6, 128, 128>}, {pipeline_mode = #tpu.pipeline_mode<synchronous>, transform_indices = @transform_2, window_bounds = array<i64: 8, 56>}, {pipeline_mode = #tpu.pipeline_mode<synchronous>, transform_indices = @transform_3, window_bounds = array<i64: 8, 1>}, {transform_indices = @transform_4, window_bounds = array<i64: 1, 8, 1024>}]} {
    %c0 = arith.constant 0 : index
    %c0_0 = arith.constant 0 : index
    %c0_1 = arith.constant 0 : index
    %c0_2 = arith.constant 0 : index
    %0 = vector.load %arg2[%c0, %c0_0, %c0_1, %c0_2] : memref<1x8x8x128xf32, #tpu.memory_space<vmem>>, vector<1x8x8x128xf32>
    %1 = vector.shape_cast %0 : vector<1x8x8x128xf32> to vector<8x8x128xf32>
    %2 = vector.shape_cast %1 : vector<8x8x128xf32> to vector<64x128xf32>
    %c0_3 = arith.constant 0 : index
    %c0_4 = arith.constant 0 : index
    %c0_5 = arith.constant 0 : index
    %3 = vector.load %arg3[%c0_3, %c0_4, %c0_5] : memref<6x128x128xf32, #tpu.memory_space<vmem>>, vector<1x128x128xf32>
    %4 = vector.shape_cast %3 : vector<1x128x128xf32> to vector<128x128xf32>
    %cst = arith.constant dense<0.000000e+00> : vector<64x128xf32>
    %5 = tpu.matmul %2, %4, %cst {dimension_numbers = #tpu.dot_dimension_numbers<[1], [0], [0], [1], [0, 0, 1, 1], [], []>} : vector<64x128xf32>, vector<128x128xf32>, vector<64x128xf32> -> vector<64x128xf32>
    %c1 = arith.constant 1 : index
    %c0_6 = arith.constant 0 : index
    %c0_7 = arith.constant 0 : index
    %6 = vector.load %arg3[%c1, %c0_6, %c0_7] : memref<6x128x128xf32, #tpu.memory_space<vmem>>, vector<1x128x128xf32>
    %7 = vector.shape_cast %6 : vector<1x128x128xf32> to vector<128x128xf32>
    %cst_8 = arith.constant dense<0.000000e+00> : vector<64x128xf32>
    %8 = tpu.matmul %2, %7, %cst_8 {dimension_numbers = #tpu.dot_dimension_numbers<[1], [0], [0], [1], [0, 0, 1, 1], [], []>} : vector<64x128xf32>, vector<128x128xf32>, vector<64x128xf32> -> vector<64x128xf32>
    %c2 = arith.constant 2 : index
    %c0_9 = arith.constant 0 : index
    %c0_10 = arith.constant 0 : index
    %9 = vector.load %arg3[%c2, %c0_9, %c0_10] : memref<6x128x128xf32, #tpu.memory_space<vmem>>, vector<1x128x128xf32>
    %10 = vector.shape_cast %9 : vector<1x128x128xf32> to vector<128x128xf32>
    %cst_11 = arith.constant dense<0.000000e+00> : vector<64x128xf32>
    %11 = tpu.matmul %2, %10, %cst_11 {dimension_numbers = #tpu.dot_dimension_numbers<[1], [0], [0], [1], [0, 0, 1, 1], [], []>} : vector<64x128xf32>, vector<128x128xf32>, vector<64x128xf32> -> vector<64x128xf32>
    %c3 = arith.constant 3 : index
    %c0_12 = arith.constant 0 : index
    %c0_13 = arith.constant 0 : index
    %12 = vector.load %arg3[%c3, %c0_12, %c0_13] : memref<6x128x128xf32, #tpu.memory_space<vmem>>, vector<1x128x128xf32>
    %13 = vector.shape_cast %12 : vector<1x128x128xf32> to vector<128x128xf32>
    %cst_14 = arith.constant dense<0.000000e+00> : vector<64x128xf32>
    %14 = tpu.matmul %2, %13, %cst_14 {dimension_numbers = #tpu.dot_dimension_numbers<[1], [0], [0], [1], [0, 0, 1, 1], [], []>} : vector<64x128xf32>, vector<128x128xf32>, vector<64x128xf32> -> vector<64x128xf32>
    %c4 = arith.constant 4 : index
    %c0_15 = arith.constant 0 : index
    %c0_16 = arith.constant 0 : index
    %15 = vector.load %arg3[%c4, %c0_15, %c0_16] : memref<6x128x128xf32, #tpu.memory_space<vmem>>, vector<1x128x128xf32>
    %16 = vector.shape_cast %15 : vector<1x128x128xf32> to vector<128x128xf32>
    %cst_17 = arith.constant dense<0.000000e+00> : vector<64x128xf32>
    %17 = tpu.matmul %2, %16, %cst_17 {dimension_numbers = #tpu.dot_dimension_numbers<[1], [0], [0], [1], [0, 0, 1, 1], [], []>} : vector<64x128xf32>, vector<128x128xf32>, vector<64x128xf32> -> vector<64x128xf32>
    %c5 = arith.constant 5 : index
    %c0_18 = arith.constant 0 : index
    %c0_19 = arith.constant 0 : index
    %18 = vector.load %arg3[%c5, %c0_18, %c0_19] : memref<6x128x128xf32, #tpu.memory_space<vmem>>, vector<1x128x128xf32>
    %19 = vector.shape_cast %18 : vector<1x128x128xf32> to vector<128x128xf32>
    %cst_20 = arith.constant dense<0.000000e+00> : vector<64x128xf32>
    %20 = tpu.matmul %2, %19, %cst_20 {dimension_numbers = #tpu.dot_dimension_numbers<[1], [0], [0], [1], [0, 0, 1, 1], [], []>} : vector<64x128xf32>, vector<128x128xf32>, vector<64x128xf32> -> vector<64x128xf32>
    %21 = vector.extract_strided_slice %2 {offsets = [0, 0], sizes = [8, 128], strides = [1, 1]} : vector<64x128xf32> to vector<8x128xf32>
    %22 = vector.extract_strided_slice %2 {offsets = [8, 0], sizes = [8, 128], strides = [1, 1]} : vector<64x128xf32> to vector<8x128xf32>
    %23 = vector.extract_strided_slice %2 {offsets = [16, 0], sizes = [8, 128], strides = [1, 1]} : vector<64x128xf32> to vector<8x128xf32>
    %24 = vector.extract_strided_slice %2 {offsets = [24, 0], sizes = [8, 128], strides = [1, 1]} : vector<64x128xf32> to vector<8x128xf32>
    %25 = vector.extract_strided_slice %2 {offsets = [32, 0], sizes = [8, 128], strides = [1, 1]} : vector<64x128xf32> to vector<8x128xf32>
    %26 = vector.extract_strided_slice %2 {offsets = [40, 0], sizes = [8, 128], strides = [1, 1]} : vector<64x128xf32> to vector<8x128xf32>
    %27 = vector.extract_strided_slice %2 {offsets = [48, 0], sizes = [8, 128], strides = [1, 1]} : vector<64x128xf32> to vector<8x128xf32>
    %28 = vector.extract_strided_slice %2 {offsets = [56, 0], sizes = [8, 128], strides = [1, 1]} : vector<64x128xf32> to vector<8x128xf32>
    %29 = tpu.concatenate %21, %22, %23, %24, %25, %26, %27, %28 in 1 : vector<8x128xf32>, vector<8x128xf32>, vector<8x128xf32>, vector<8x128xf32>, vector<8x128xf32>, vector<8x128xf32>, vector<8x128xf32>, vector<8x128xf32> -> vector<8x1024xf32>
    %30 = vector.extract_strided_slice %5 {offsets = [0, 0], sizes = [8, 128], strides = [1, 1]} : vector<64x128xf32> to vector<8x128xf32>
    %31 = vector.extract_strided_slice %5 {offsets = [8, 0], sizes = [8, 128], strides = [1, 1]} : vector<64x128xf32> to vector<8x128xf32>
    %32 = vector.extract_strided_slice %5 {offsets = [16, 0], sizes = [8, 128], strides = [1, 1]} : vector<64x128xf32> to vector<8x128xf32>
    %33 = vector.extract_strided_slice %5 {offsets = [24, 0], sizes = [8, 128], strides = [1, 1]} : vector<64x128xf32> to vector<8x128xf32>
    %34 = vector.extract_strided_slice %5 {offsets = [32, 0], sizes = [8, 128], strides = [1, 1]} : vector<64x128xf32> to vector<8x128xf32>
    %35 = vector.extract_strided_slice %5 {offsets = [40, 0], sizes = [8, 128], strides = [1, 1]} : vector<64x128xf32> to vector<8x128xf32>
    %36 = vector.extract_strided_slice %5 {offsets = [48, 0], sizes = [8, 128], strides = [1, 1]} : vector<64x128xf32> to vector<8x128xf32>
    %37 = vector.extract_strided_slice %5 {offsets = [56, 0], sizes = [8, 128], strides = [1, 1]} : vector<64x128xf32> to vector<8x128xf32>
    %38 = tpu.concatenate %30, %31, %32, %33, %34, %35, %36, %37 in 1 : vector<8x128xf32>, vector<8x128xf32>, vector<8x128xf32>, vector<8x128xf32>, vector<8x128xf32>, vector<8x128xf32>, vector<8x128xf32>, vector<8x128xf32> -> vector<8x1024xf32>
    %39 = vector.extract_strided_slice %8 {offsets = [0, 0], sizes = [8, 128], strides = [1, 1]} : vector<64x128xf32> to vector<8x128xf32>
    %40 = vector.extract_strided_slice %8 {offsets = [8, 0], sizes = [8, 128], strides = [1, 1]} : vector<64x128xf32> to vector<8x128xf32>
    %41 = vector.extract_strided_slice %8 {offsets = [16, 0], sizes = [8, 128], strides = [1, 1]} : vector<64x128xf32> to vector<8x128xf32>
    %42 = vector.extract_strided_slice %8 {offsets = [24, 0], sizes = [8, 128], strides = [1, 1]} : vector<64x128xf32> to vector<8x128xf32>
    %43 = vector.extract_strided_slice %8 {offsets = [32, 0], sizes = [8, 128], strides = [1, 1]} : vector<64x128xf32> to vector<8x128xf32>
    %44 = vector.extract_strided_slice %8 {offsets = [40, 0], sizes = [8, 128], strides = [1, 1]} : vector<64x128xf32> to vector<8x128xf32>
    %45 = vector.extract_strided_slice %8 {offsets = [48, 0], sizes = [8, 128], strides = [1, 1]} : vector<64x128xf32> to vector<8x128xf32>
    %46 = vector.extract_strided_slice %8 {offsets = [56, 0], sizes = [8, 128], strides = [1, 1]} : vector<64x128xf32> to vector<8x128xf32>
    %47 = tpu.concatenate %39, %40, %41, %42, %43, %44, %45, %46 in 1 : vector<8x128xf32>, vector<8x128xf32>, vector<8x128xf32>, vector<8x128xf32>, vector<8x128xf32>, vector<8x128xf32>, vector<8x128xf32>, vector<8x128xf32> -> vector<8x1024xf32>
    %48 = vector.extract_strided_slice %11 {offsets = [0, 0], sizes = [8, 128], strides = [1, 1]} : vector<64x128xf32> to vector<8x128xf32>
    %49 = vector.extract_strided_slice %11 {offsets = [8, 0], sizes = [8, 128], strides = [1, 1]} : vector<64x128xf32> to vector<8x128xf32>
    %50 = vector.extract_strided_slice %11 {offsets = [16, 0], sizes = [8, 128], strides = [1, 1]} : vector<64x128xf32> to vector<8x128xf32>
    %51 = vector.extract_strided_slice %11 {offsets = [24, 0], sizes = [8, 128], strides = [1, 1]} : vector<64x128xf32> to vector<8x128xf32>
    %52 = vector.extract_strided_slice %11 {offsets = [32, 0], sizes = [8, 128], strides = [1, 1]} : vector<64x128xf32> to vector<8x128xf32>
    %53 = vector.extract_strided_slice %11 {offsets = [40, 0], sizes = [8, 128], strides = [1, 1]} : vector<64x128xf32> to vector<8x128xf32>
    %54 = vector.extract_strided_slice %11 {offsets = [48, 0], sizes = [8, 128], strides = [1, 1]} : vector<64x128xf32> to vector<8x128xf32>
    %55 = vector.extract_strided_slice %11 {offsets = [56, 0], sizes = [8, 128], strides = [1, 1]} : vector<64x128xf32> to vector<8x128xf32>
    %56 = tpu.concatenate %48, %49, %50, %51, %52, %53, %54, %55 in 1 : vector<8x128xf32>, vector<8x128xf32>, vector<8x128xf32>, vector<8x128xf32>, vector<8x128xf32>, vector<8x128xf32>, vector<8x128xf32>, vector<8x128xf32> -> vector<8x1024xf32>
    %57 = vector.extract_strided_slice %14 {offsets = [0, 0], sizes = [8, 128], strides = [1, 1]} : vector<64x128xf32> to vector<8x128xf32>
    %58 = vector.extract_strided_slice %14 {offsets = [8, 0], sizes = [8, 128], strides = [1, 1]} : vector<64x128xf32> to vector<8x128xf32>
    %59 = vector.extract_strided_slice %14 {offsets = [16, 0], sizes = [8, 128], strides = [1, 1]} : vector<64x128xf32> to vector<8x128xf32>
    %60 = vector.extract_strided_slice %14 {offsets = [24, 0], sizes = [8, 128], strides = [1, 1]} : vector<64x128xf32> to vector<8x128xf32>
    %61 = vector.extract_strided_slice %14 {offsets = [32, 0], sizes = [8, 128], strides = [1, 1]} : vector<64x128xf32> to vector<8x128xf32>
    %62 = vector.extract_strided_slice %14 {offsets = [40, 0], sizes = [8, 128], strides = [1, 1]} : vector<64x128xf32> to vector<8x128xf32>
    %63 = vector.extract_strided_slice %14 {offsets = [48, 0], sizes = [8, 128], strides = [1, 1]} : vector<64x128xf32> to vector<8x128xf32>
    %64 = vector.extract_strided_slice %14 {offsets = [56, 0], sizes = [8, 128], strides = [1, 1]} : vector<64x128xf32> to vector<8x128xf32>
    %65 = tpu.concatenate %57, %58, %59, %60, %61, %62, %63, %64 in 1 : vector<8x128xf32>, vector<8x128xf32>, vector<8x128xf32>, vector<8x128xf32>, vector<8x128xf32>, vector<8x128xf32>, vector<8x128xf32>, vector<8x128xf32> -> vector<8x1024xf32>
    %66 = vector.extract_strided_slice %17 {offsets = [0, 0], sizes = [8, 128], strides = [1, 1]} : vector<64x128xf32> to vector<8x128xf32>
    %67 = vector.extract_strided_slice %17 {offsets = [8, 0], sizes = [8, 128], strides = [1, 1]} : vector<64x128xf32> to vector<8x128xf32>
    %68 = vector.extract_strided_slice %17 {offsets = [16, 0], sizes = [8, 128], strides = [1, 1]} : vector<64x128xf32> to vector<8x128xf32>
    %69 = vector.extract_strided_slice %17 {offsets = [24, 0], sizes = [8, 128], strides = [1, 1]} : vector<64x128xf32> to vector<8x128xf32>
    %70 = vector.extract_strided_slice %17 {offsets = [32, 0], sizes = [8, 128], strides = [1, 1]} : vector<64x128xf32> to vector<8x128xf32>
    %71 = vector.extract_strided_slice %17 {offsets = [40, 0], sizes = [8, 128], strides = [1, 1]} : vector<64x128xf32> to vector<8x128xf32>
    %72 = vector.extract_strided_slice %17 {offsets = [48, 0], sizes = [8, 128], strides = [1, 1]} : vector<64x128xf32> to vector<8x128xf32>
    %73 = vector.extract_strided_slice %17 {offsets = [56, 0], sizes = [8, 128], strides = [1, 1]} : vector<64x128xf32> to vector<8x128xf32>
    %74 = tpu.concatenate %66, %67, %68, %69, %70, %71, %72, %73 in 1 : vector<8x128xf32>, vector<8x128xf32>, vector<8x128xf32>, vector<8x128xf32>, vector<8x128xf32>, vector<8x128xf32>, vector<8x128xf32>, vector<8x128xf32> -> vector<8x1024xf32>
    %75 = vector.extract_strided_slice %20 {offsets = [0, 0], sizes = [8, 128], strides = [1, 1]} : vector<64x128xf32> to vector<8x128xf32>
    %76 = vector.extract_strided_slice %20 {offsets = [8, 0], sizes = [8, 128], strides = [1, 1]} : vector<64x128xf32> to vector<8x128xf32>
    %77 = vector.extract_strided_slice %20 {offsets = [16, 0], sizes = [8, 128], strides = [1, 1]} : vector<64x128xf32> to vector<8x128xf32>
    %78 = vector.extract_strided_slice %20 {offsets = [24, 0], sizes = [8, 128], strides = [1, 1]} : vector<64x128xf32> to vector<8x128xf32>
    %79 = vector.extract_strided_slice %20 {offsets = [32, 0], sizes = [8, 128], strides = [1, 1]} : vector<64x128xf32> to vector<8x128xf32>
    %80 = vector.extract_strided_slice %20 {offsets = [40, 0], sizes = [8, 128], strides = [1, 1]} : vector<64x128xf32> to vector<8x128xf32>
    %81 = vector.extract_strided_slice %20 {offsets = [48, 0], sizes = [8, 128], strides = [1, 1]} : vector<64x128xf32> to vector<8x128xf32>
    %82 = vector.extract_strided_slice %20 {offsets = [56, 0], sizes = [8, 128], strides = [1, 1]} : vector<64x128xf32> to vector<8x128xf32>
    %83 = tpu.concatenate %75, %76, %77, %78, %79, %80, %81, %82 in 1 : vector<8x128xf32>, vector<8x128xf32>, vector<8x128xf32>, vector<8x128xf32>, vector<8x128xf32>, vector<8x128xf32>, vector<8x128xf32>, vector<8x128xf32> -> vector<8x1024xf32>
    %84 = tpu.concatenate %29, %38, %47, %56, %65, %74, %83 in 0 : vector<8x1024xf32>, vector<8x1024xf32>, vector<8x1024xf32>, vector<8x1024xf32>, vector<8x1024xf32>, vector<8x1024xf32>, vector<8x1024xf32> -> vector<56x1024xf32>
    %c0_21 = arith.constant 0 : index
    %c0_22 = arith.constant 0 : index
    %85 = vector.load %arg4[%c0_21, %c0_22] : memref<8x56xf32, #tpu.memory_space<vmem>>, vector<8x56xf32>
    %cst_23 = arith.constant dense<0.000000e+00> : vector<8x1024xf32>
    %86 = tpu.matmul %85, %84, %cst_23 {dimension_numbers = #tpu.dot_dimension_numbers<[1], [0], [0], [1], [0, 0, 1, 1], [], []>} : vector<8x56xf32>, vector<56x1024xf32>, vector<8x1024xf32> -> vector<8x1024xf32>
    %c0_24 = arith.constant 0 : index
    %c0_25 = arith.constant 0 : index
    %87 = vector.load %arg5[%c0_24, %c0_25] : memref<8x1xf32, #tpu.memory_space<vmem>>, vector<8x1xf32>
    %88 = vector.broadcast %87 : vector<8x1xf32> to vector<8x1024xf32>
    %89 = arith.addf %86, %88 : vector<8x1024xf32>
    %c0_26 = arith.constant 0 : index
    %c0_27 = arith.constant 0 : index
    %c0_28 = arith.constant 0 : index
    %90 = vector.load %arg6[%c0_26, %c0_27, %c0_28] : memref<1x8x1024xf32, #tpu.memory_space<vmem>>, vector<1x8x1024xf32>
    %91 = vector.shape_cast %90 : vector<1x8x1024xf32> to vector<8x1024xf32>
    %92 = vector.shape_cast %89 : vector<8x1024xf32> to vector<1x8x1024xf32>
    tpu.vector_store %arg6[%c0_26, %c0_27, %c0_28], %92 {strides = array<i32>} : memref<1x8x1024xf32, #tpu.memory_space<vmem>>, vector<1x8x1024xf32>,
    return
  }
  func.func @transform_0(%arg0: i32, %arg1: i32) -> (i32, i32, i32, i32) {
    %c0_i32 = arith.constant 0 : i32
    %c0_i32_0 = arith.constant 0 : i32
    %c0_i32_1 = arith.constant 0 : i32
    return %arg0, %arg1, %c0_i32, %c0_i32_0 : i32, i32, i32, i32
  }
  func.func @transform_1(%arg0: i32, %arg1: i32) -> (i32, i32, i32) {
    %c0_i32 = arith.constant 0 : i32
    %c0_i32_0 = arith.constant 0 : i32
    %c0_i32_1 = arith.constant 0 : i32
    %c0_i32_2 = arith.constant 0 : i32
    return %c0_i32, %c0_i32_0, %c0_i32_1 : i32, i32, i32
  }
  func.func @transform_2(%arg0: i32, %arg1: i32) -> (i32, i32) {
    %c0_i32 = arith.constant 0 : i32
    %c0_i32_0 = arith.constant 0 : i32
    %c0_i32_1 = arith.constant 0 : i32
    return %c0_i32, %c0_i32_0 : i32, i32
  }
  func.func @transform_3(%arg0: i32, %arg1: i32) -> (i32, i32) {
    %c0_i32 = arith.constant 0 : i32
    %c0_i32_0 = arith.constant 0 : i32
    %c0_i32_1 = arith.constant 0 : i32
    return %c0_i32, %c0_i32_0 : i32, i32
  }
  func.func @transform_4(%arg0: i32, %arg1: i32) -> (i32, i32, i32) {
    %c0_i32 = arith.constant 0 : i32
    %c0_i32_0 = arith.constant 0 : i32
    return %arg0, %c0_i32, %arg1 : i32, i32, i32
  }
}

</mosaic_0001>

<llo_original>
// kernel: tpu_custom_call.1
$region0: #{tpu_custom_call.1}
  #allocation0 [shape = 'u32[]', space=smem, size = 0x4, offset = 0x4, fixed_abs, tag = 'smem constant byte address 0x4 - core index']
  #allocation1 [shape = 'u32[144,128]{1,0:T(1,128)}', space=vmem, size = 0x12000, scoped, tag = 'internal scratch']
  %s0 = inlined_call_operand.hbm [shape: f32[2,8,8,128], index: 0, kind: input, shape index: {}]
  %s1 = inlined_call_operand.hbm [shape: f32[6,128,128], index: 1, kind: input, shape index: {}]
  %s2 = inlined_call_operand.vmem [shape: f32[8,56], index: 2, kind: input, shape index: {}]
  %s3 = inlined_call_operand.vmem [shape: f32[8,1], index: 3, kind: input, shape index: {}]
  %s4 = inlined_call_operand.hbm [shape: f32[2,8,1024], index: 4, kind: output, shape index: {}]
  %s5 = sld [smem:[#allocation0]]
  $region57: #{tpu_custom_call.1} parent=0
    _
  %s7 = ssub.s32 1, %s5
  %s8 = scalar_select 0, %s7, %s5
  $region1: #{tpu_custom_call.1} parent=0
    #allocation2 [shape = 'u8[65536]{0}', space=vmem, size = 0x10000, scoped, tag = 'input window, operand 0']
    #allocation3 [shape = 's32[2]{0}', space=sflag, size = 0x8, scoped, tag = 'scoped memory for tpu_custom_call.1']
    #allocation4 [shape = 's32[2]{0}', space=sflag, size = 0x8, scoped, tag = 'scoped memory for tpu_custom_call.1']
    #allocation5 [shape = 'u8[393216]{0}', space=vmem, size = 0x60000, scoped, tag = 'input window, operand 1, single buffered']
    #allocation6 [shape = 's32[1]{0}', space=sflag, size = 0x4, scoped, tag = 'scoped memory for tpu_custom_call.1']
    #allocation7 [shape = 'u8[65536]{0}', space=vmem, size = 0x10000, scoped, tag = 'output window, operand 0']
    %9 = vsyncpa [#allocation3], 0
    %s10 = scalar_lea.sflag [#allocation3], 1
    %11 = vsyncpa %s10, 0
    %12 = vsyncpa [#allocation6], 0
    %13 = vsyncpa [#allocation4], 0
    %s14 = scalar_lea.sflag [#allocation4], 1
    %15 = vsyncpa %s14, 0
    loop: start=0, step=1, limit=4
    $region2: #{tpu_custom_call.1} parent=1 // loop_pre_header
      _
    $region3: #{tpu_custom_call.1} parent=1 // loop_header
      %s17 = sphi 0, %s21
      %p18 = scmp.ge.s32.totalorder %s17, 4
      %s24 = sphi 0, %s36
      %s25 = sphi 0, %s32
      %s26 = sphi 0, %s24
      %s27 = sphi 0, %s25
      %s28 = sphi 0, %s26
      %s29 = sphi 0, %s27
      %s41 = sphi 0, %s43
      %s44 = sphi 0, %s41
      %s45 = sphi 0, %s44
      %s61 = sphi 0, %s45
      %s65 = sphi 0, %s65
      %s67 = sphi 0, %s65
      %s68 = sphi 0, %s67
      %s82 = sphi 0, %s68
      %s86 = sphi 0, %s86
      %s88 = sphi 0, %s86
      %s89 = sphi 0, %s88
      %s103 = sphi 0, %s89
      %s107 = sphi 0, %s107
      %s109 = sphi 0, %s107
      %s110 = sphi 0, %s109
      %s124 = sphi 0, %s110
      %s132 = sphi 0, %s134
      %s135 = sphi 0, %s132
      %s136 = sphi 0, %s135
      %s152 = sphi 0, %s136
    $region4: #{tpu_custom_call.1} parent=1 // loop_header_branch
      %20 = sbr.rel (%p18) target = $region8
    $region5: #{tpu_custom_call.1} parent=1 // loop_body
      %s22 = ssub.s32 %s17, 1
      %s23 = ssub.s32 %s17, 2
      %s30 = sadd.s32 1, %s25
      %p31 = scmp.ge.s32.totalorder %s30, 1
      %s32 = scalar_select %p31, 0, %s30
      %s33 = sadd.s32 1, %s24
      %s34 = scalar_select %p31, %s33, %s24
      %p35 = scmp.ge.s32.totalorder %s34, 2
      %s36 = scalar_select %p35, 0, %s34
      %s37 = ssub.s32 %s24, %s36
      %s38 = ssub.s32 %s25, %s32
      %s39 = sor.u32 %s37, %s38
      %p40 = scmp.eq.s32.totalorder %s39, 0
      %s42 = sadd.s32 %s41, 1
      %s43 = scalar_select %p40, %s41, %s42
      %p46 = pneg %p40
      %p47 = scmp.eq.s32.totalorder %s17, 1
      %p48 = por %p46, %p47
      %p49 = scmp.ne.s32.totalorder %s41, %s44
      %p50 = scmp.eq.s32.totalorder %s17, 0
      %p51 = por %p49, %p50
      %p52 = scmp.ne.s32.totalorder %s41, %s44
      %p53 = scmp.eq.s32.totalorder %s22, 1
      %p54 = por %p52, %p53
      %p55 = scmp.ne.s32.totalorder %s44, %s45
      %p56 = scmp.eq.s32.totalorder %s22, 0
      %p57 = por %p55, %p56
      %p58 = scmp.ne.s32.totalorder %s44, %s45
      %p59 = scmp.eq.s32.totalorder %s23, 1
      %p60 = por %p58, %p59
      %p62 = scmp.ne.s32.totalorder %s45, %s61
      %p63 = scmp.eq.s32.totalorder %s23, 0
      %p64 = por %p62, %p63
      %s66 = sadd.s32 %s65, 1
      %p69 = scmp.eq.s32.totalorder %s17, 1
      %p70 = scmp.ne.s32.totalorder %s65, %s67
      %p71 = scmp.eq.s32.totalorder %s17, 0
      %p72 = por %p70, %p71
      %p73 = scmp.ne.s32.totalorder %s65, %s67
      %p74 = scmp.eq.s32.totalorder %s22, 1
      %p75 = por %p73, %p74
      %p76 = scmp.ne.s32.totalorder %s67, %s68
      %p77 = scmp.eq.s32.totalorder %s22, 0
      %p78 = por %p76, %p77
      %p79 = scmp.ne.s32.totalorder %s67, %s68
      %p80 = scmp.eq.s32.totalorder %s23, 1
      %p81 = por %p79, %p80
      %p83 = scmp.ne.s32.totalorder %s68, %s82
      %p84 = scmp.eq.s32.totalorder %s23, 0
      %p85 = por %p83, %p84
      %s87 = sadd.s32 %s86, 1
      %p90 = scmp.eq.s32.totalorder %s17, 1
      %p91 = scmp.ne.s32.totalorder %s86, %s88
      %p92 = scmp.eq.s32.totalorder %s17, 0
      %p93 = por %p91, %p92
      %p94 = scmp.ne.s32.totalorder %s86, %s88
      %p95 = scmp.eq.s32.totalorder %s22, 1
      %p96 = por %p94, %p95
      %p97 = scmp.ne.s32.totalorder %s88, %s89
      %p98 = scmp.eq.s32.totalorder %s22, 0
      %p99 = por %p97, %p98
      %p100 = scmp.ne.s32.totalorder %s88, %s89
      %p101 = scmp.eq.s32.totalorder %s23, 1
      %p102 = por %p100, %p101
      %p104 = scmp.ne.s32.totalorder %s89, %s103
      %p105 = scmp.eq.s32.totalorder %s23, 0
      %p106 = por %p104, %p105
      %s108 = sadd.s32 %s107, 1
      %p111 = scmp.eq.s32.totalorder %s17, 1
      %p112 = scmp.ne.s32.totalorder %s107, %s109
      %p113 = scmp.eq.s32.totalorder %s17, 0
      %p114 = por %p112, %p113
      %p115 = scmp.ne.s32.totalorder %s107, %s109
      %p116 = scmp.eq.s32.totalorder %s22, 1
      %p117 = por %p115, %p116
      %p118 = scmp.ne.s32.totalorder %s109, %s110
      %p119 = scmp.eq.s32.totalorder %s22, 0
      %p120 = por %p118, %p119
      %p121 = scmp.ne.s32.totalorder %s109, %s110
      %p122 = scmp.eq.s32.totalorder %s23, 1
      %p123 = por %p121, %p122
      %p125 = scmp.ne.s32.totalorder %s110, %s124
      %p126 = scmp.eq.s32.totalorder %s23, 0
      %p127 = por %p125, %p126
      %s128 = ssub.s32 %s24, %s36
      %s129 = ssub.s32 %s25, %s32
      %s130 = sor.u32 %s128, %s129
      %p131 = scmp.eq.s32.totalorder %s130, 0
      %s133 = sadd.s32 %s132, 1
      %s134 = scalar_select %p131, %s132, %s133
      %p137 = pneg %p131
      %p138 = scmp.eq.s32.totalorder %s17, 1
      %p139 = por %p137, %p138
      %p140 = scmp.ne.s32.totalorder %s132, %s135
      %p141 = scmp.eq.s32.totalorder %s17, 0
      %p142 = por %p140, %p141
      %p143 = scmp.ne.s32.totalorder %s132, %s135
      %p144 = scmp.eq.s32.totalorder %s22, 1
      %p145 = por %p143, %p144
      %p146 = scmp.ne.s32.totalorder %s135, %s136
      %p147 = scmp.eq.s32.totalorder %s22, 0
      %p148 = por %p146, %p147
      %p149 = scmp.ne.s32.totalorder %s135, %s136
      %p150 = scmp.eq.s32.totalorder %s23, 1
      %p151 = por %p149, %p150
      %p153 = scmp.ne.s32.totalorder %s136, %s152
      %p154 = scmp.eq.s32.totalorder %s23, 0
      %p155 = por %p153, %p154
      %p156 = scmp.le.s32.totalorder 1, %s17
      %p157 = scmp.lt.s32.totalorder %s17, 3
      %p158 = pnand %p156, %p157
      %p159 = pneg %p158
      // Predicated region
      $region9: #{tpu_custom_call.1} parent=5 // pred_check
        _
      $region10: #{tpu_custom_call.1} parent=5 // pred_check_branch
        %161 = sbr.rel (%p158) target = $region12
      $region11: #{tpu_custom_call.1} parent=5 // pred_region
        %s162 = ssub.s32 %s17, 1
        // Predicated region
        $region13: #{tpu_custom_call.1} parent=11 // pred_check
          %p163 = pneg %p78
        $region14: #{tpu_custom_call.1} parent=11 // pred_check_branch
          %165 = sbr.rel (%p163) target = $region16
        $region15: #{tpu_custom_call.1} parent=11 // pred_region
          %s167 = ssub.s32 12288, 12288
          %168 = vsyncadd [#allocation6], %s167
          %s169 = sshll.u32 [#allocation5], 4
          %s170 = int_to_ptr.vmem [resolvable:$true] %s169
          %175 = dma.hbm_to_vmem [thread:$0]  %s1, 12288, %s170, [#allocation6], 128, 128, 8
        $region16: #{tpu_custom_call.1} parent=11 // pred_fallthru
          _
        // Predicated region
        $region17: #{tpu_custom_call.1} parent=11 // pred_check
          %p176 = pneg %p99
        $region18: #{tpu_custom_call.1} parent=11 // pred_check_branch
          %178 = sbr.rel (%p176) target = $region20
        $region19: #{tpu_custom_call.1} parent=11 // pred_region
          _
        $region20: #{tpu_custom_call.1} parent=11 // pred_fallthru
          _
        // Predicated region
        $region21: #{tpu_custom_call.1} parent=11 // pred_check
          %p179 = pneg %p120
        $region22: #{tpu_custom_call.1} parent=11 // pred_check_branch
          %181 = sbr.rel (%p179) target = $region24
        $region23: #{tpu_custom_call.1} parent=11 // pred_region
          _
        $region24: #{tpu_custom_call.1} parent=11 // pred_fallthru
          _
      $region12: #{tpu_custom_call.1} parent=5 // pred_fallthru
        _
      %p182 = scmp.lt.s32.totalorder %s17, 2
      // Predicated region
      $region25: #{tpu_custom_call.1} parent=5 // pred_check
        %p183 = pneg %p182
      $region26: #{tpu_custom_call.1} parent=5 // pred_check_branch
        %185 = sbr.rel (%p183) target = $region28
      $region27: #{tpu_custom_call.1} parent=5 // pred_region
        // Predicated region
        $region29: #{tpu_custom_call.1} parent=27 // pred_check
          %p186 = pneg %p51
        $region30: #{tpu_custom_call.1} parent=27 // pred_check_branch
          %188 = sbr.rel (%p186) target = $region32
        $region31: #{tpu_custom_call.1} parent=27 // pred_region
          %s189 = sand.u32 %s41, 1
          %s190 = scalar_lea.sflag [#allocation3], %s189
          %s191 = sand.u32 %s41, 1
          %s192 = smul.addr %s191, 64
          %s193 = scalar_lea.vmem [#allocation2], %s192
          %s194 = smul.u32 8, %s25
          %s196 = ssub.s32 1024, 1024
          %197 = vsyncadd %s190, %s196
          %s198 = smul.addr %s24, 8
          %s199 = sadd.s32 %s194, %s198
          %s200 = smul.addr %s199, 128
          %s201 = scalar_lea.hbm %s0, %s200
          %s202 = sshll.u32 %s193, 4
          %s203 = int_to_ptr.vmem [resolvable:$true] %s202
          %208 = dma.hbm_to_vmem [thread:$0]  %s201, 1024, %s203, %s190, 128, 128, 8
        $region32: #{tpu_custom_call.1} parent=27 // pred_fallthru
          _
      $region28: #{tpu_custom_call.1} parent=5 // pred_fallthru
        _
      %p209 = scmp.le.s32.totalorder 1, %s17
      %p210 = scmp.lt.s32.totalorder %s17, 3
      %p211 = pnand %p209, %p210
      %p212 = pneg %p211
      // Predicated region
      $region33: #{tpu_custom_call.1} parent=5 // pred_check
        _
      $region34: #{tpu_custom_call.1} parent=5 // pred_check_branch
        %214 = sbr.rel (%p211) target = $region36
      $region35: #{tpu_custom_call.1} parent=5 // pred_region
        %s215 = ssub.s32 %s17, 1
        %s216 = sand.u32 %s44, 1
        %s217 = scalar_lea.sflag [#allocation3], %s216
        %s218 = sand.u32 %s44, 1
        %s219 = smul.addr %s218, 64
        %s220 = scalar_lea.vmem [#allocation2], %s219
        // Predicated region
        $region37: #{tpu_custom_call.1} parent=35 // pred_check
          %p221 = pneg %p57
        $region38: #{tpu_custom_call.1} parent=35 // pred_check_branch
          %223 = sbr.rel (%p221) target = $region40
        $region39: #{tpu_custom_call.1} parent=35 // pred_region
          %224 = dma.done %s217, 1024
        $region40: #{tpu_custom_call.1} parent=35 // pred_fallthru
          _
        // Predicated region
        $region41: #{tpu_custom_call.1} parent=35 // pred_check
          %p225 = pneg %p78
        $region42: #{tpu_custom_call.1} parent=35 // pred_check_branch
          %227 = sbr.rel (%p225) target = $region44
        $region43: #{tpu_custom_call.1} parent=35 // pred_region
          %228 = dma.done [#allocation6], 12288
        $region44: #{tpu_custom_call.1} parent=35 // pred_fallthru
          _
        %s229 = sand.u32 %s44, 1
        %s230 = scalar_lea.sflag [#allocation3], %s229
        %s231 = sand.u32 %s44, 1
        %s232 = smul.addr %s231, 64
        %s233 = scalar_lea.vmem [#allocation2], %s232
        %p234 = pneg %p57
        %p235 = pneg %p54
        %p236 = pneg %p78
        %p237 = pneg %p75
        %p238 = pneg %p99
        %p239 = pneg %p96
        %p240 = pneg %p120
        %p241 = pneg %p117
        %p242 = pneg %p148
        %p243 = pneg %p145
        %s244 = sand.u32 %s135, 1
        %s245 = scalar_lea.sflag [#allocation4], %s244
        %s246 = sand.u32 %s135, 1
        %s247 = smul.addr %s246, 64
        %s248 = scalar_lea.vmem [#allocation7], %s247
        %s249 = smul.u32 8, %s27
        %s250 = smul.u32 8, %s27
        %v251 = vld [vmem:[%s220] sm:$0xff]
        %v252 = vld [vmem:[%s220 + $0x8] sm:$0xff]
        %v253 = vld [vmem:[%s220 + $0x10] sm:$0xff]
        %v254 = vld [vmem:[%s220 + $0x18] sm:$0xff]
        %v255 = vld [vmem:[%s220 + $0x20] sm:$0xff]
        %v256 = vld [vmem:[%s220 + $0x28] sm:$0xff]
        %v257 = vld [vmem:[%s220 + $0x30] sm:$0xff]
        %v258 = vld [vmem:[%s220 + $0x38] sm:$0xff]
        %v259 = vld [vmem:[#allocation5] sm:$0xff]
        %v260 = vld [vmem:[#allocation5 + $0x8] sm:$0xff]
        %v261 = vld [vmem:[#allocation5 + $0x10] sm:$0xff]
        %v262 = vld [vmem:[#allocation5 + $0x18] sm:$0xff]
        %v263 = vld [vmem:[#allocation5 + $0x20] sm:$0xff]
        %v264 = vld [vmem:[#allocation5 + $0x28] sm:$0xff]
        %v265 = vld [vmem:[#allocation5 + $0x30] sm:$0xff]
        %v266 = vld [vmem:[#allocation5 + $0x38] sm:$0xff]
        %v267 = vld [vmem:[#allocation5 + $0x40] sm:$0xff]
        %v268 = vld [vmem:[#allocation5 + $0x48] sm:$0xff]
        %v269 = vld [vmem:[#allocation5 + $0x50] sm:$0xff]
        %v270 = vld [vmem:[#allocation5 + $0x58] sm:$0xff]
        %v271 = vld [vmem:[#allocation5 + $0x60] sm:$0xff]
        %v272 = vld [vmem:[#allocation5 + $0x68] sm:$0xff]
        %v273 = vld [vmem:[#allocation5 + $0x70] sm:$0xff]
        %v274 = vld [vmem:[#allocation5 + $0x78] sm:$0xff]
        %275 = vmatprep.subr.mxu0 0.0
        %276 = vmatpush1.msra.mxu0 %v274
        %277 = vmatprep.subr.mxu0 0.0
        %278 = vmatpush1.msra.mxu0 %v273
        %279 = vmatprep.subr.mxu0 0.0
        %280 = vmatpush1.msra.mxu0 %v272
        %281 = vmatprep.subr.mxu0 0.0
        %282 = vmatpush1.msra.mxu0 %v271
        %283 = vmatprep.subr.mxu0 0.0
        %284 = vmatpush1.msra.mxu0 %v270
        %285 = vmatprep.subr.mxu0 0.0
        %286 = vmatpush1.msra.mxu0 %v269
        %287 = vmatprep.subr.mxu0 0.0
        %288 = vmatpush1.msra.mxu0 %v268
        %289 = vmatprep.subr.mxu0 0.0
        %290 = vmatpush1.msra.mxu0 %v267
        %291 = vmatprep.subr.mxu0 0.0
        %292 = vmatpush1.msra.mxu0 %v266
        %293 = vmatprep.subr.mxu0 0.0
        %294 = vmatpush1.msra.mxu0 %v265
        %295 = vmatprep.subr.mxu0 0.0
        %296 = vmatpush1.msra.mxu0 %v264
        %297 = vmatprep.subr.mxu0 0.0
        %298 = vmatpush1.msra.mxu0 %v263
        %299 = vmatprep.subr.mxu0 0.0
        %300 = vmatpush1.msra.mxu0 %v262
        %301 = vmatprep.subr.mxu0 0.0
        %302 = vmatpush1.msra.mxu0 %v261
        %303 = vmatprep.subr.mxu0 0.0
        %304 = vmatpush1.msra.mxu0 %v260
        %305 = vmatprep.subr.mxu0 0.0
        %306 = vmatpush1.msra.mxu0 %v259
        %307 = vmatprep.subr.mxu0 0.0
        %308 = vmatpush2.msra.mxu0 0.0
        %309 = vmatprep.subr.mxu0 0.0
        %310 = vmatpush2.msra.mxu0 0.0
        %311 = vmatprep.subr.mxu0 0.0
        %312 = vmatpush2.msra.mxu0 0.0
        %313 = vmatprep.subr.mxu0 0.0
        %314 = vmatpush2.msra.mxu0 0.0
        %315 = vmatprep.subr.mxu0 0.0
        %316 = vmatpush2.msra.mxu0 0.0
        %317 = vmatprep.subr.mxu0 0.0
        %318 = vmatpush2.msra.mxu0 0.0
        %319 = vmatprep.subr.mxu0 0.0
        %320 = vmatpush2.msra.mxu0 0.0
        %321 = vmatprep.subr.mxu0 0.0
        %322 = vmatpush2.msra.mxu0 0.0
        %323 = vmatprep.subr.mxu0 0.0
        %324 = vmatpush2.msra.mxu0 0.0
        %325 = vmatprep.subr.mxu0 0.0
        %326 = vmatpush2.msra.mxu0 0.0
        %327 = vmatprep.subr.mxu0 0.0
        %328 = vmatpush2.msra.mxu0 0.0
        %329 = vmatprep.subr.mxu0 0.0
        %330 = vmatpush2.msra.mxu0 0.0
        %331 = vmatprep.subr.mxu0 0.0
        %332 = vmatpush2.msra.mxu0 0.0
        %333 = vmatprep.subr.mxu0 0.0
        %334 = vmatpush2.msra.mxu0 0.0
        %335 = vmatprep.subr.mxu0 0.0
        %336 = vmatpush2.msra.mxu0 0.0
        %337 = vmatprep.subr.mxu0 0.0
        %338 = vmatpush2.msra.mxu0 0.0
        %339 = vmatprep.mubr.f32.mxu0 0.0
        %340 = vmatmul.mubr.f32.gmra.mxu0 %v251
        %v341 = vpop.f32.mrf.mxu0
        %v342 = vadd.f32 0.0, %v341
        %v343 = vpop.f32.mrf.mxu0
        %344 = vmatprep.mubr.f32.mxu0 0.0
        %345 = vmatmul.mubr.f32.gmra.mxu0 %v252
        %v346 = vpop.f32.mrf.mxu0
        %v347 = vadd.f32 0.0, %v346
        %v348 = vpop.f32.mrf.mxu0
        %349 = vmatprep.mubr.f32.mxu0 0.0
        %350 = vmatmul.mubr.f32.gmra.mxu0 %v253
        %v351 = vpop.f32.mrf.mxu0
        %v352 = vadd.f32 0.0, %v351
        %v353 = vpop.f32.mrf.mxu0
        %354 = vmatprep.mubr.f32.mxu0 0.0
        %355 = vmatmul.mubr.f32.gmra.mxu0 %v254
        %v356 = vpop.f32.mrf.mxu0
        %v357 = vadd.f32 0.0, %v356
        %v358 = vpop.f32.mrf.mxu0
        %359 = vmatprep.mubr.f32.mxu0 0.0
        %360 = vmatmul.mubr.f32.gmra.mxu0 %v255
        %v361 = vpop.f32.mrf.mxu0
        %v362 = vadd.f32 0.0, %v361
        %v363 = vpop.f32.mrf.mxu0
        %364 = vmatprep.mubr.f32.mxu0 0.0
        %365 = vmatmul.mubr.f32.gmra.mxu0 %v256
        %v366 = vpop.f32.mrf.mxu0
        %v367 = vadd.f32 0.0, %v366
        %v368 = vpop.f32.mrf.mxu0
        %369 = vmatprep.mubr.f32.mxu0 0.0
        %370 = vmatmul.mubr.f32.gmra.mxu0 %v257
        %v371 = vpop.f32.mrf.mxu0
        %v372 = vadd.f32 0.0, %v371
        %v373 = vpop.f32.mrf.mxu0
        %374 = vmatprep.mubr.f32.mxu0 0.0
        %375 = vmatmul.mubr.f32.gmra.mxu0 %v258
        %v376 = vpop.f32.mrf.mxu0
        %v377 = vadd.f32 0.0, %v376
        %v378 = vpop.f32.mrf.mxu0
        %379 = vdwg.mxu0
        %s380 = scalar_lea.vmem [#allocation5], 128
        %v381 = vld [vmem:[%s380] sm:$0xff]
        %v382 = vld [vmem:[%s380 + $0x8] sm:$0xff]
        %v383 = vld [vmem:[%s380 + $0x10] sm:$0xff]
        %v384 = vld [vmem:[%s380 + $0x18] sm:$0xff]
        %v385 = vld [vmem:[%s380 + $0x20] sm:$0xff]
        %v386 = vld [vmem:[%s380 + $0x28] sm:$0xff]
        %v387 = vld [vmem:[%s380 + $0x30] sm:$0xff]
        %v388 = vld [vmem:[%s380 + $0x38] sm:$0xff]
        %v389 = vld [vmem:[%s380 + $0x40] sm:$0xff]
        %v390 = vld [vmem:[%s380 + $0x48] sm:$0xff]
        %v391 = vld [vmem:[%s380 + $0x50] sm:$0xff]
        %v392 = vld [vmem:[%s380 + $0x58] sm:$0xff]
        %v393 = vld [vmem:[%s380 + $0x60] sm:$0xff]
        %v394 = vld [vmem:[%s380 + $0x68] sm:$0xff]
        %v395 = vld [vmem:[%s380 + $0x70] sm:$0xff]
        %v396 = vld [vmem:[%s380 + $0x78] sm:$0xff]
        %397 = vmatprep.subr.mxu0 0.0
        %398 = vmatpush1.msra.mxu0 %v396
        %399 = vmatprep.subr.mxu0 0.0
        %400 = vmatpush1.msra.mxu0 %v395
        %401 = vmatprep.subr.mxu0 0.0
        %402 = vmatpush1.msra.mxu0 %v394
        %403 = vmatprep.subr.mxu0 0.0
        %404 = vmatpush1.msra.mxu0 %v393
        %405 = vmatprep.subr.mxu0 0.0
        %406 = vmatpush1.msra.mxu0 %v392
        %407 = vmatprep.subr.mxu0 0.0
        %408 = vmatpush1.msra.mxu0 %v391
        %409 = vmatprep.subr.mxu0 0.0
        %410 = vmatpush1.msra.mxu0 %v390
        %411 = vmatprep.subr.mxu0 0.0
        %412 = vmatpush1.msra.mxu0 %v389
        %413 = vmatprep.subr.mxu0 0.0
        %414 = vmatpush1.msra.mxu0 %v388
        %415 = vmatprep.subr.mxu0 0.0
        %416 = vmatpush1.msra.mxu0 %v387
        %417 = vmatprep.subr.mxu0 0.0
        %418 = vmatpush1.msra.mxu0 %v386
        %419 = vmatprep.subr.mxu0 0.0
        %420 = vmatpush1.msra.mxu0 %v385
        %421 = vmatprep.subr.mxu0 0.0
        %422 = vmatpush1.msra.mxu0 %v384
        %423 = vmatprep.subr.mxu0 0.0
        %424 = vmatpush1.msra.mxu0 %v383
        %425 = vmatprep.subr.mxu0 0.0
        %426 = vmatpush1.msra.mxu0 %v382
        %427 = vmatprep.subr.mxu0 0.0
        %428 = vmatpush1.msra.mxu0 %v381
        %429 = vmatprep.subr.mxu0 0.0
        %430 = vmatpush2.msra.mxu0 0.0
        %431 = vmatprep.subr.mxu0 0.0
        %432 = vmatpush2.msra.mxu0 0.0
        %433 = vmatprep.subr.mxu0 0.0
        %434 = vmatpush2.msra.mxu0 0.0
        %435 = vmatprep.subr.mxu0 0.0
        %436 = vmatpush2.msra.mxu0 0.0
        %437 = vmatprep.subr.mxu0 0.0
        %438 = vmatpush2.msra.mxu0 0.0
        %439 = vmatprep.subr.mxu0 0.0
        %440 = vmatpush2.msra.mxu0 0.0
        %441 = vmatprep.subr.mxu0 0.0
        %442 = vmatpush2.msra.mxu0 0.0
        %443 = vmatprep.subr.mxu0 0.0
        %444 = vmatpush2.msra.mxu0 0.0
        %445 = vmatprep.subr.mxu0 0.0
        %446 = vmatpush2.msra.mxu0 0.0
        %447 = vmatprep.subr.mxu0 0.0
        %448 = vmatpush2.msra.mxu0 0.0
        %449 = vmatprep.subr.mxu0 0.0
        %450 = vmatpush2.msra.mxu0 0.0
        %451 = vmatprep.subr.mxu0 0.0
        %452 = vmatpush2.msra.mxu0 0.0
        %453 = vmatprep.subr.mxu0 0.0
        %454 = vmatpush2.msra.mxu0 0.0
        %455 = vmatprep.subr.mxu0 0.0
        %456 = vmatpush2.msra.mxu0 0.0
        %457 = vmatprep.subr.mxu0 0.0
        %458 = vmatpush2.msra.mxu0 0.0
        %459 = vmatprep.subr.mxu0 0.0
        %460 = vmatpush2.msra.mxu0 0.0
        %461 = vmatprep.mubr.f32.mxu0 0.0
        %462 = vmatmul.mubr.f32.gmra.mxu0 %v251
        %v463 = vpop.f32.mrf.mxu0
        %v464 = vadd.f32 0.0, %v463
        %v465 = vpop.f32.mrf.mxu0
        %466 = vmatprep.mubr.f32.mxu0 0.0
        %467 = vmatmul.mubr.f32.gmra.mxu0 %v252
        %v468 = vpop.f32.mrf.mxu0
        %v469 = vadd.f32 0.0, %v468
        %v470 = vpop.f32.mrf.mxu0
        %471 = vmatprep.mubr.f32.mxu0 0.0
        %472 = vmatmul.mubr.f32.gmra.mxu0 %v253
        %v473 = vpop.f32.mrf.mxu0
        %v474 = vadd.f32 0.0, %v473
        %v475 = vpop.f32.mrf.mxu0
        %476 = vmatprep.mubr.f32.mxu0 0.0
        %477 = vmatmul.mubr.f32.gmra.mxu0 %v254
        %v478 = vpop.f32.mrf.mxu0
        %v479 = vadd.f32 0.0, %v478
        %v480 = vpop.f32.mrf.mxu0
        %481 = vmatprep.mubr.f32.mxu0 0.0
        %482 = vmatmul.mubr.f32.gmra.mxu0 %v255
        %v483 = vpop.f32.mrf.mxu0
        %v484 = vadd.f32 0.0, %v483
        %v485 = vpop.f32.mrf.mxu0
        %486 = vmatprep.mubr.f32.mxu0 0.0
        %487 = vmatmul.mubr.f32.gmra.mxu0 %v256
        %v488 = vpop.f32.mrf.mxu0
        %v489 = vadd.f32 0.0, %v488
        %v490 = vpop.f32.mrf.mxu0
        %491 = vmatprep.mubr.f32.mxu0 0.0
        %492 = vmatmul.mubr.f32.gmra.mxu0 %v257
        %v493 = vpop.f32.mrf.mxu0
        %v494 = vadd.f32 0.0, %v493
        %v495 = vpop.f32.mrf.mxu0
        %496 = vmatprep.mubr.f32.mxu0 0.0
        %497 = vmatmul.mubr.f32.gmra.mxu0 %v258
        %v498 = vpop.f32.mrf.mxu0
        %v499 = vadd.f32 0.0, %v498
        %v500 = vpop.f32.mrf.mxu0
        %501 = vdwg.mxu0
        %s502 = scalar_lea.vmem [#allocation5], 256
        %v503 = vld [vmem:[%s502] sm:$0xff]
        %v504 = vld [vmem:[%s502 + $0x8] sm:$0xff]
        %v505 = vld [vmem:[%s502 + $0x10] sm:$0xff]
        %v506 = vld [vmem:[%s502 + $0x18] sm:$0xff]
        %v507 = vld [vmem:[%s502 + $0x20] sm:$0xff]
        %v508 = vld [vmem:[%s502 + $0x28] sm:$0xff]
        %v509 = vld [vmem:[%s502 + $0x30] sm:$0xff]
        %v510 = vld [vmem:[%s502 + $0x38] sm:$0xff]
        %v511 = vld [vmem:[%s502 + $0x40] sm:$0xff]
        %v512 = vld [vmem:[%s502 + $0x48] sm:$0xff]
        %v513 = vld [vmem:[%s502 + $0x50] sm:$0xff]
        %v514 = vld [vmem:[%s502 + $0x58] sm:$0xff]
        %v515 = vld [vmem:[%s502 + $0x60] sm:$0xff]
        %v516 = vld [vmem:[%s502 + $0x68] sm:$0xff]
        %v517 = vld [vmem:[%s502 + $0x70] sm:$0xff]
        %v518 = vld [vmem:[%s502 + $0x78] sm:$0xff]
        %519 = vmatprep.subr.mxu0 0.0
        %520 = vmatpush1.msra.mxu0 %v518
        %521 = vmatprep.subr.mxu0 0.0
        %522 = vmatpush1.msra.mxu0 %v517
        %523 = vmatprep.subr.mxu0 0.0
        %524 = vmatpush1.msra.mxu0 %v516
        %525 = vmatprep.subr.mxu0 0.0
        %526 = vmatpush1.msra.mxu0 %v515
        %527 = vmatprep.subr.mxu0 0.0
        %528 = vmatpush1.msra.mxu0 %v514
        %529 = vmatprep.subr.mxu0 0.0
        %530 = vmatpush1.msra.mxu0 %v513
        %531 = vmatprep.subr.mxu0 0.0
        %532 = vmatpush1.msra.mxu0 %v512
        %533 = vmatprep.subr.mxu0 0.0
        %534 = vmatpush1.msra.mxu0 %v511
        %535 = vmatprep.subr.mxu0 0.0
        %536 = vmatpush1.msra.mxu0 %v510
        %537 = vmatprep.subr.mxu0 0.0
        %538 = vmatpush1.msra.mxu0 %v509
        %539 = vmatprep.subr.mxu0 0.0
        %540 = vmatpush1.msra.mxu0 %v508
        %541 = vmatprep.subr.mxu0 0.0
        %542 = vmatpush1.msra.mxu0 %v507
        %543 = vmatprep.subr.mxu0 0.0
        %544 = vmatpush1.msra.mxu0 %v506
        %545 = vmatprep.subr.mxu0 0.0
        %546 = vmatpush1.msra.mxu0 %v505
        %547 = vmatprep.subr.mxu0 0.0
        %548 = vmatpush1.msra.mxu0 %v504
        %549 = vmatprep.subr.mxu0 0.0
        %550 = vmatpush1.msra.mxu0 %v503
        %551 = vmatprep.subr.mxu0 0.0
        %552 = vmatpush2.msra.mxu0 0.0
        %553 = vmatprep.subr.mxu0 0.0
        %554 = vmatpush2.msra.mxu0 0.0
        %555 = vmatprep.subr.mxu0 0.0
        %556 = vmatpush2.msra.mxu0 0.0
        %557 = vmatprep.subr.mxu0 0.0
        %558 = vmatpush2.msra.mxu0 0.0
        %559 = vmatprep.subr.mxu0 0.0
        %560 = vmatpush2.msra.mxu0 0.0
        %561 = vmatprep.subr.mxu0 0.0
        %562 = vmatpush2.msra.mxu0 0.0
        %563 = vmatprep.subr.mxu0 0.0
        %564 = vmatpush2.msra.mxu0 0.0
        %565 = vmatprep.subr.mxu0 0.0
        %566 = vmatpush2.msra.mxu0 0.0
        %567 = vmatprep.subr.mxu0 0.0
        %568 = vmatpush2.msra.mxu0 0.0
        %569 = vmatprep.subr.mxu0 0.0
        %570 = vmatpush2.msra.mxu0 0.0
        %571 = vmatprep.subr.mxu0 0.0
        %572 = vmatpush2.msra.mxu0 0.0
        %573 = vmatprep.subr.mxu0 0.0
        %574 = vmatpush2.msra.mxu0 0.0
        %575 = vmatprep.subr.mxu0 0.0
        %576 = vmatpush2.msra.mxu0 0.0
        %577 = vmatprep.subr.mxu0 0.0
        %578 = vmatpush2.msra.mxu0 0.0
        %579 = vmatprep.subr.mxu0 0.0
        %580 = vmatpush2.msra.mxu0 0.0
        %581 = vmatprep.subr.mxu0 0.0
        %582 = vmatpush2.msra.mxu0 0.0
        %583 = vmatprep.mubr.f32.mxu0 0.0
        %584 = vmatmul.mubr.f32.gmra.mxu0 %v251
        %v585 = vpop.f32.mrf.mxu0
        %v586 = vadd.f32 0.0, %v585
        %v587 = vpop.f32.mrf.mxu0
        %588 = vmatprep.mubr.f32.mxu0 0.0
        %589 = vmatmul.mubr.f32.gmra.mxu0 %v252
        %v590 = vpop.f32.mrf.mxu0
        %v591 = vadd.f32 0.0, %v590
        %v592 = vpop.f32.mrf.mxu0
        %593 = vmatprep.mubr.f32.mxu0 0.0
        %594 = vmatmul.mubr.f32.gmra.mxu0 %v253
        %v595 = vpop.f32.mrf.mxu0
        %v596 = vadd.f32 0.0, %v595
        %v597 = vpop.f32.mrf.mxu0
        %598 = vmatprep.mubr.f32.mxu0 0.0
        %599 = vmatmul.mubr.f32.gmra.mxu0 %v254
        %v600 = vpop.f32.mrf.mxu0
        %v601 = vadd.f32 0.0, %v600
        %v602 = vpop.f32.mrf.mxu0
        %603 = vmatprep.mubr.f32.mxu0 0.0
        %604 = vmatmul.mubr.f32.gmra.mxu0 %v255
        %v605 = vpop.f32.mrf.mxu0
        %v606 = vadd.f32 0.0, %v605
        %v607 = vpop.f32.mrf.mxu0
        %608 = vmatprep.mubr.f32.mxu0 0.0
        %609 = vmatmul.mubr.f32.gmra.mxu0 %v256
        %v610 = vpop.f32.mrf.mxu0
        %v611 = vadd.f32 0.0, %v610
        %v612 = vpop.f32.mrf.mxu0
        %613 = vmatprep.mubr.f32.mxu0 0.0
        %614 = vmatmul.mubr.f32.gmra.mxu0 %v257
        %v615 = vpop.f32.mrf.mxu0
        %v616 = vadd.f32 0.0, %v615
        %v617 = vpop.f32.mrf.mxu0
        %618 = vmatprep.mubr.f32.mxu0 0.0
        %619 = vmatmul.mubr.f32.gmra.mxu0 %v258
        %v620 = vpop.f32.mrf.mxu0
        %v621 = vadd.f32 0.0, %v620
        %v622 = vpop.f32.mrf.mxu0
        %623 = vdwg.mxu0
        %s624 = scalar_lea.vmem [#allocation5], 384
        %v625 = vld [vmem:[%s624] sm:$0xff]
        %v626 = vld [vmem:[%s624 + $0x8] sm:$0xff]
        %v627 = vld [vmem:[%s624 + $0x10] sm:$0xff]
        %v628 = vld [vmem:[%s624 + $0x18] sm:$0xff]
        %v629 = vld [vmem:[%s624 + $0x20] sm:$0xff]
        %v630 = vld [vmem:[%s624 + $0x28] sm:$0xff]
        %v631 = vld [vmem:[%s624 + $0x30] sm:$0xff]
        %v632 = vld [vmem:[%s624 + $0x38] sm:$0xff]
        %v633 = vld [vmem:[%s624 + $0x40] sm:$0xff]
        %v634 = vld [vmem:[%s624 + $0x48] sm:$0xff]
        %v635 = vld [vmem:[%s624 + $0x50] sm:$0xff]
        %v636 = vld [vmem:[%s624 + $0x58] sm:$0xff]
        %v637 = vld [vmem:[%s624 + $0x60] sm:$0xff]
        %v638 = vld [vmem:[%s624 + $0x68] sm:$0xff]
        %v639 = vld [vmem:[%s624 + $0x70] sm:$0xff]
        %v640 = vld [vmem:[%s624 + $0x78] sm:$0xff]
        %641 = vmatprep.subr.mxu0 0.0
        %642 = vmatpush1.msra.mxu0 %v640
        %643 = vmatprep.subr.mxu0 0.0
        %644 = vmatpush1.msra.mxu0 %v639
        %645 = vmatprep.subr.mxu0 0.0
        %646 = vmatpush1.msra.mxu0 %v638
        %647 = vmatprep.subr.mxu0 0.0
        %648 = vmatpush1.msra.mxu0 %v637
        %649 = vmatprep.subr.mxu0 0.0
        %650 = vmatpush1.msra.mxu0 %v636
        %651 = vmatprep.subr.mxu0 0.0
        %652 = vmatpush1.msra.mxu0 %v635
        %653 = vmatprep.subr.mxu0 0.0
        %654 = vmatpush1.msra.mxu0 %v634
        %655 = vmatprep.subr.mxu0 0.0
        %656 = vmatpush1.msra.mxu0 %v633
        %657 = vmatprep.subr.mxu0 0.0
        %658 = vmatpush1.msra.mxu0 %v632
        %659 = vmatprep.subr.mxu0 0.0
        %660 = vmatpush1.msra.mxu0 %v631
        %661 = vmatprep.subr.mxu0 0.0
        %662 = vmatpush1.msra.mxu0 %v630
        %663 = vmatprep.subr.mxu0 0.0
        %664 = vmatpush1.msra.mxu0 %v629
        %665 = vmatprep.subr.mxu0 0.0
        %666 = vmatpush1.msra.mxu0 %v628
        %667 = vmatprep.subr.mxu0 0.0
        %668 = vmatpush1.msra.mxu0 %v627
        %669 = vmatprep.subr.mxu0 0.0
        %670 = vmatpush1.msra.mxu0 %v626
        %671 = vmatprep.subr.mxu0 0.0
        %672 = vmatpush1.msra.mxu0 %v625
        %673 = vmatprep.subr.mxu0 0.0
        %674 = vmatpush2.msra.mxu0 0.0
        %675 = vmatprep.subr.mxu0 0.0
        %676 = vmatpush2.msra.mxu0 0.0
        %677 = vmatprep.subr.mxu0 0.0
        %678 = vmatpush2.msra.mxu0 0.0
        %679 = vmatprep.subr.mxu0 0.0
        %680 = vmatpush2.msra.mxu0 0.0
        %681 = vmatprep.subr.mxu0 0.0
        %682 = vmatpush2.msra.mxu0 0.0
        %683 = vmatprep.subr.mxu0 0.0
        %684 = vmatpush2.msra.mxu0 0.0
        %685 = vmatprep.subr.mxu0 0.0
        %686 = vmatpush2.msra.mxu0 0.0
        %687 = vmatprep.subr.mxu0 0.0
        %688 = vmatpush2.msra.mxu0 0.0
        %689 = vmatprep.subr.mxu0 0.0
        %690 = vmatpush2.msra.mxu0 0.0
        %691 = vmatprep.subr.mxu0 0.0
        %692 = vmatpush2.msra.mxu0 0.0
        %693 = vmatprep.subr.mxu0 0.0
        %694 = vmatpush2.msra.mxu0 0.0
        %695 = vmatprep.subr.mxu0 0.0
        %696 = vmatpush2.msra.mxu0 0.0
        %697 = vmatprep.subr.mxu0 0.0
        %698 = vmatpush2.msra.mxu0 0.0
        %699 = vmatprep.subr.mxu0 0.0
        %700 = vmatpush2.msra.mxu0 0.0
        %701 = vmatprep.subr.mxu0 0.0
        %702 = vmatpush2.msra.mxu0 0.0
        %703 = vmatprep.subr.mxu0 0.0
        %704 = vmatpush2.msra.mxu0 0.0
        %705 = vmatprep.mubr.f32.mxu0 0.0
        %706 = vmatmul.mubr.f32.gmra.mxu0 %v251
        %v707 = vpop.f32.mrf.mxu0
        %v708 = vadd.f32 0.0, %v707
        %v709 = vpop.f32.mrf.mxu0
        %710 = vmatprep.mubr.f32.mxu0 0.0
        %711 = vmatmul.mubr.f32.gmra.mxu0 %v252
        %v712 = vpop.f32.mrf.mxu0
        %v713 = vadd.f32 0.0, %v712
        %v714 = vpop.f32.mrf.mxu0
        %715 = vmatprep.mubr.f32.mxu0 0.0
        %716 = vmatmul.mubr.f32.gmra.mxu0 %v253
        %v717 = vpop.f32.mrf.mxu0
        %v718 = vadd.f32 0.0, %v717
        %v719 = vpop.f32.mrf.mxu0
        %720 = vmatprep.mubr.f32.mxu0 0.0
        %721 = vmatmul.mubr.f32.gmra.mxu0 %v254
        %v722 = vpop.f32.mrf.mxu0
        %v723 = vadd.f32 0.0, %v722
        %v724 = vpop.f32.mrf.mxu0
        %725 = vmatprep.mubr.f32.mxu0 0.0
        %726 = vmatmul.mubr.f32.gmra.mxu0 %v255
        %v727 = vpop.f32.mrf.mxu0
        %v728 = vadd.f32 0.0, %v727
        %v729 = vpop.f32.mrf.mxu0
        %730 = vmatprep.mubr.f32.mxu0 0.0
        %731 = vmatmul.mubr.f32.gmra.mxu0 %v256
        %v732 = vpop.f32.mrf.mxu0
        %v733 = vadd.f32 0.0, %v732
        %v734 = vpop.f32.mrf.mxu0
        %735 = vmatprep.mubr.f32.mxu0 0.0
        %736 = vmatmul.mubr.f32.gmra.mxu0 %v257
        %v737 = vpop.f32.mrf.mxu0
        %v738 = vadd.f32 0.0, %v737
        %v739 = vpop.f32.mrf.mxu0
        %740 = vmatprep.mubr.f32.mxu0 0.0
        %741 = vmatmul.mubr.f32.gmra.mxu0 %v258
        %v742 = vpop.f32.mrf.mxu0
        %v743 = vadd.f32 0.0, %v742
        %v744 = vpop.f32.mrf.mxu0
        %745 = vdwg.mxu0
        %s746 = scalar_lea.vmem [#allocation5], 512
        %v747 = vld [vmem:[%s746] sm:$0xff]
        %v748 = vld [vmem:[%s746 + $0x8] sm:$0xff]
        %v749 = vld [vmem:[%s746 + $0x10] sm:$0xff]
        %v750 = vld [vmem:[%s746 + $0x18] sm:$0xff]
        %v751 = vld [vmem:[%s746 + $0x20] sm:$0xff]
        %v752 = vld [vmem:[%s746 + $0x28] sm:$0xff]
        %v753 = vld [vmem:[%s746 + $0x30] sm:$0xff]
        %v754 = vld [vmem:[%s746 + $0x38] sm:$0xff]
        %v755 = vld [vmem:[%s746 + $0x40] sm:$0xff]
        %v756 = vld [vmem:[%s746 + $0x48] sm:$0xff]
        %v757 = vld [vmem:[%s746 + $0x50] sm:$0xff]
        %v758 = vld [vmem:[%s746 + $0x58] sm:$0xff]
        %v759 = vld [vmem:[%s746 + $0x60] sm:$0xff]
        %v760 = vld [vmem:[%s746 + $0x68] sm:$0xff]
        %v761 = vld [vmem:[%s746 + $0x70] sm:$0xff]
        %v762 = vld [vmem:[%s746 + $0x78] sm:$0xff]
        %763 = vmatprep.subr.mxu0 0.0
        %764 = vmatpush1.msra.mxu0 %v762
        %765 = vmatprep.subr.mxu0 0.0
        %766 = vmatpush1.msra.mxu0 %v761
        %767 = vmatprep.subr.mxu0 0.0
        %768 = vmatpush1.msra.mxu0 %v760
        %769 = vmatprep.subr.mxu0 0.0
        %770 = vmatpush1.msra.mxu0 %v759
        %771 = vmatprep.subr.mxu0 0.0
        %772 = vmatpush1.msra.mxu0 %v758
        %773 = vmatprep.subr.mxu0 0.0
        %774 = vmatpush1.msra.mxu0 %v757
        %775 = vmatprep.subr.mxu0 0.0
        %776 = vmatpush1.msra.mxu0 %v756
        %777 = vmatprep.subr.mxu0 0.0
        %778 = vmatpush1.msra.mxu0 %v755
        %779 = vmatprep.subr.mxu0 0.0
        %780 = vmatpush1.msra.mxu0 %v754
        %781 = vmatprep.subr.mxu0 0.0
        %782 = vmatpush1.msra.mxu0 %v753
        %783 = vmatprep.subr.mxu0 0.0
        %784 = vmatpush1.msra.mxu0 %v752
        %785 = vmatprep.subr.mxu0 0.0
        %786 = vmatpush1.msra.mxu0 %v751
        %787 = vmatprep.subr.mxu0 0.0
        %788 = vmatpush1.msra.mxu0 %v750
        %789 = vmatprep.subr.mxu0 0.0
        %790 = vmatpush1.msra.mxu0 %v749
        %791 = vmatprep.subr.mxu0 0.0
        %792 = vmatpush1.msra.mxu0 %v748
        %793 = vmatprep.subr.mxu0 0.0
        %794 = vmatpush1.msra.mxu0 %v747
        %795 = vmatprep.subr.mxu0 0.0
        %796 = vmatpush2.msra.mxu0 0.0
        %797 = vmatprep.subr.mxu0 0.0
        %798 = vmatpush2.msra.mxu0 0.0
        %799 = vmatprep.subr.mxu0 0.0
        %800 = vmatpush2.msra.mxu0 0.0
        %801 = vmatprep.subr.mxu0 0.0
        %802 = vmatpush2.msra.mxu0 0.0
        %803 = vmatprep.subr.mxu0 0.0
        %804 = vmatpush2.msra.mxu0 0.0
        %805 = vmatprep.subr.mxu0 0.0
        %806 = vmatpush2.msra.mxu0 0.0
        %807 = vmatprep.subr.mxu0 0.0
        %808 = vmatpush2.msra.mxu0 0.0
        %809 = vmatprep.subr.mxu0 0.0
        %810 = vmatpush2.msra.mxu0 0.0
        %811 = vmatprep.subr.mxu0 0.0
        %812 = vmatpush2.msra.mxu0 0.0
        %813 = vmatprep.subr.mxu0 0.0
        %814 = vmatpush2.msra.mxu0 0.0
        %815 = vmatprep.subr.mxu0 0.0
        %816 = vmatpush2.msra.mxu0 0.0
        %817 = vmatprep.subr.mxu0 0.0
        %818 = vmatpush2.msra.mxu0 0.0
        %819 = vmatprep.subr.mxu0 0.0
        %820 = vmatpush2.msra.mxu0 0.0
        %821 = vmatprep.subr.mxu0 0.0
        %822 = vmatpush2.msra.mxu0 0.0
        %823 = vmatprep.subr.mxu0 0.0
        %824 = vmatpush2.msra.mxu0 0.0
        %825 = vmatprep.subr.mxu0 0.0
        %826 = vmatpush2.msra.mxu0 0.0
        %827 = vmatprep.mubr.f32.mxu0 0.0
        %828 = vmatmul.mubr.f32.gmra.mxu0 %v251
        %v829 = vpop.f32.mrf.mxu0
        %v830 = vadd.f32 0.0, %v829
        %v831 = vpop.f32.mrf.mxu0
        %832 = vmatprep.mubr.f32.mxu0 0.0
        %833 = vmatmul.mubr.f32.gmra.mxu0 %v252
        %v834 = vpop.f32.mrf.mxu0
        %v835 = vadd.f32 0.0, %v834
        %v836 = vpop.f32.mrf.mxu0
        %837 = vmatprep.mubr.f32.mxu0 0.0
        %838 = vmatmul.mubr.f32.gmra.mxu0 %v253
        %v839 = vpop.f32.mrf.mxu0
        %v840 = vadd.f32 0.0, %v839
        %v841 = vpop.f32.mrf.mxu0
        %842 = vmatprep.mubr.f32.mxu0 0.0
        %843 = vmatmul.mubr.f32.gmra.mxu0 %v254
        %v844 = vpop.f32.mrf.mxu0
        %v845 = vadd.f32 0.0, %v844
        %v846 = vpop.f32.mrf.mxu0
        %847 = vmatprep.mubr.f32.mxu0 0.0
        %848 = vmatmul.mubr.f32.gmra.mxu0 %v255
        %v849 = vpop.f32.mrf.mxu0
        %v850 = vadd.f32 0.0, %v849
        %v851 = vpop.f32.mrf.mxu0
        %852 = vmatprep.mubr.f32.mxu0 0.0
        %853 = vmatmul.mubr.f32.gmra.mxu0 %v256
        %v854 = vpop.f32.mrf.mxu0
        %v855 = vadd.f32 0.0, %v854
        %v856 = vpop.f32.mrf.mxu0
        %857 = vmatprep.mubr.f32.mxu0 0.0
        %858 = vmatmul.mubr.f32.gmra.mxu0 %v257
        %v859 = vpop.f32.mrf.mxu0
        %v860 = vadd.f32 0.0, %v859
        %v861 = vpop.f32.mrf.mxu0
        %862 = vmatprep.mubr.f32.mxu0 0.0
        %863 = vmatmul.mubr.f32.gmra.mxu0 %v258
        %v864 = vpop.f32.mrf.mxu0
        %v865 = vadd.f32 0.0, %v864
        %v866 = vpop.f32.mrf.mxu0
        %867 = vdwg.mxu0
        %s868 = scalar_lea.vmem [#allocation5], 640
        %v869 = vld [vmem:[%s868] sm:$0xff]
        %v870 = vld [vmem:[%s868 + $0x8] sm:$0xff]
        %v871 = vld [vmem:[%s868 + $0x10] sm:$0xff]
        %v872 = vld [vmem:[%s868 + $0x18] sm:$0xff]
        %v873 = vld [vmem:[%s868 + $0x20] sm:$0xff]
        %v874 = vld [vmem:[%s868 + $0x28] sm:$0xff]
        %v875 = vld [vmem:[%s868 + $0x30] sm:$0xff]
        %v876 = vld [vmem:[%s868 + $0x38] sm:$0xff]
        %v877 = vld [vmem:[%s868 + $0x40] sm:$0xff]
        %v878 = vld [vmem:[%s868 + $0x48] sm:$0xff]
        %v879 = vld [vmem:[%s868 + $0x50] sm:$0xff]
        %v880 = vld [vmem:[%s868 + $0x58] sm:$0xff]
        %v881 = vld [vmem:[%s868 + $0x60] sm:$0xff]
        %v882 = vld [vmem:[%s868 + $0x68] sm:$0xff]
        %v883 = vld [vmem:[%s868 + $0x70] sm:$0xff]
        %v884 = vld [vmem:[%s868 + $0x78] sm:$0xff]
        %885 = vmatprep.subr.mxu0 0.0
        %886 = vmatpush1.msra.mxu0 %v884
        %887 = vmatprep.subr.mxu0 0.0
        %888 = vmatpush1.msra.mxu0 %v883
        %889 = vmatprep.subr.mxu0 0.0
        %890 = vmatpush1.msra.mxu0 %v882
        %891 = vmatprep.subr.mxu0 0.0
        %892 = vmatpush1.msra.mxu0 %v881
        %893 = vmatprep.subr.mxu0 0.0
        %894 = vmatpush1.msra.mxu0 %v880
        %895 = vmatprep.subr.mxu0 0.0
        %896 = vmatpush1.msra.mxu0 %v879
        %897 = vmatprep.subr.mxu0 0.0
        %898 = vmatpush1.msra.mxu0 %v878
        %899 = vmatprep.subr.mxu0 0.0
        %900 = vmatpush1.msra.mxu0 %v877
        %901 = vmatprep.subr.mxu0 0.0
        %902 = vmatpush1.msra.mxu0 %v876
        %903 = vmatprep.subr.mxu0 0.0
        %904 = vmatpush1.msra.mxu0 %v875
        %905 = vmatprep.subr.mxu0 0.0
        %906 = vmatpush1.msra.mxu0 %v874
        %907 = vmatprep.subr.mxu0 0.0
        %908 = vmatpush1.msra.mxu0 %v873
        %909 = vmatprep.subr.mxu0 0.0
        %910 = vmatpush1.msra.mxu0 %v872
        %911 = vmatprep.subr.mxu0 0.0
        %912 = vmatpush1.msra.mxu0 %v871
        %913 = vmatprep.subr.mxu0 0.0
        %914 = vmatpush1.msra.mxu0 %v870
        %915 = vmatprep.subr.mxu0 0.0
        %916 = vmatpush1.msra.mxu0 %v869
        %917 = vmatprep.subr.mxu0 0.0
        %918 = vmatpush2.msra.mxu0 0.0
        %919 = vmatprep.subr.mxu0 0.0
        %920 = vmatpush2.msra.mxu0 0.0
        %921 = vmatprep.subr.mxu0 0.0
        %922 = vmatpush2.msra.mxu0 0.0
        %923 = vmatprep.subr.mxu0 0.0
        %924 = vmatpush2.msra.mxu0 0.0
        %925 = vmatprep.subr.mxu0 0.0
        %926 = vmatpush2.msra.mxu0 0.0
        %927 = vmatprep.subr.mxu0 0.0
        %928 = vmatpush2.msra.mxu0 0.0
        %929 = vmatprep.subr.mxu0 0.0
        %930 = vmatpush2.msra.mxu0 0.0
        %931 = vmatprep.subr.mxu0 0.0
        %932 = vmatpush2.msra.mxu0 0.0
        %933 = vmatprep.subr.mxu0 0.0
        %934 = vmatpush2.msra.mxu0 0.0
        %935 = vmatprep.subr.mxu0 0.0
        %936 = vmatpush2.msra.mxu0 0.0
        %937 = vmatprep.subr.mxu0 0.0
        %938 = vmatpush2.msra.mxu0 0.0
        %939 = vmatprep.subr.mxu0 0.0
        %940 = vmatpush2.msra.mxu0 0.0
        %941 = vmatprep.subr.mxu0 0.0
        %942 = vmatpush2.msra.mxu0 0.0
        %943 = vmatprep.subr.mxu0 0.0
        %944 = vmatpush2.msra.mxu0 0.0
        %945 = vmatprep.subr.mxu0 0.0
        %946 = vmatpush2.msra.mxu0 0.0
        %947 = vmatprep.subr.mxu0 0.0
        %948 = vmatpush2.msra.mxu0 0.0
        %949 = vmatprep.mubr.f32.mxu0 0.0
        %950 = vmatmul.mubr.f32.gmra.mxu0 %v251
        %v951 = vpop.f32.mrf.mxu0
        %v952 = vadd.f32 0.0, %v951
        %v953 = vpop.f32.mrf.mxu0
        %954 = vmatprep.mubr.f32.mxu0 0.0
        %955 = vmatmul.mubr.f32.gmra.mxu0 %v252
        %v956 = vpop.f32.mrf.mxu0
        %v957 = vadd.f32 0.0, %v956
        %v958 = vpop.f32.mrf.mxu0
        %959 = vmatprep.mubr.f32.mxu0 0.0
        %960 = vmatmul.mubr.f32.gmra.mxu0 %v253
        %v961 = vpop.f32.mrf.mxu0
        %v962 = vadd.f32 0.0, %v961
        %v963 = vpop.f32.mrf.mxu0
        %964 = vmatprep.mubr.f32.mxu0 0.0
        %965 = vmatmul.mubr.f32.gmra.mxu0 %v254
        %v966 = vpop.f32.mrf.mxu0
        %v967 = vadd.f32 0.0, %v966
        %v968 = vpop.f32.mrf.mxu0
        %969 = vmatprep.mubr.f32.mxu0 0.0
        %970 = vmatmul.mubr.f32.gmra.mxu0 %v255
        %v971 = vpop.f32.mrf.mxu0
        %v972 = vadd.f32 0.0, %v971
        %v973 = vpop.f32.mrf.mxu0
        %974 = vmatprep.mubr.f32.mxu0 0.0
        %975 = vmatmul.mubr.f32.gmra.mxu0 %v256
        %v976 = vpop.f32.mrf.mxu0
        %v977 = vadd.f32 0.0, %v976
        %v978 = vpop.f32.mrf.mxu0
        %979 = vmatprep.mubr.f32.mxu0 0.0
        %980 = vmatmul.mubr.f32.gmra.mxu0 %v257
        %v981 = vpop.f32.mrf.mxu0
        %v982 = vadd.f32 0.0, %v981
        %v983 = vpop.f32.mrf.mxu0
        %984 = vmatprep.mubr.f32.mxu0 0.0
        %985 = vmatmul.mubr.f32.gmra.mxu0 %v258
        %v986 = vpop.f32.mrf.mxu0
        %v987 = vadd.f32 0.0, %v986
        %v988 = vpop.f32.mrf.mxu0
        %989 = vdwg.mxu0
        %v990 = vld [vmem:[%s2] sm:$0xff]
        %v991 = vld [vmem:[%s3] sm:$0xff]
        %993 = vset.pattern.permute.xlu0 0
        %994 = vperm.xlu0 %993, %v991
        %v995 = vpop.permute.xlu0 %994
        %vm997 = vcmask 457728
        %v999 = vsel %vm997, %v990, 0
        %1001 = vmatprep.subr.mxu0 0.0
        %1002 = vmatpush1.msra.mxu0 0.0
        %1003 = vmatprep.subr.mxu0 0.0
        %1004 = vmatpush1.msra.mxu0 0.0
        %1005 = vmatprep.subr.mxu0 0.0
        %1006 = vmatpush1.msra.mxu0 0.0
        %1007 = vmatprep.subr.mxu0 0.0
        %1008 = vmatpush1.msra.mxu0 0.0
        %1009 = vmatprep.subr.mxu0 0.0
        %1010 = vmatpush1.msra.mxu0 0.0
        %1011 = vmatprep.subr.mxu0 0.0
        %1012 = vmatpush1.msra.mxu0 0.0
        %1013 = vmatprep.subr.mxu0 0.0
        %1014 = vmatpush1.msra.mxu0 0.0
        %1015 = vmatprep.subr.mxu0 0.0
        %1016 = vmatpush1.msra.mxu0 0.0
        %1017 = vmatprep.subr.mxu0 0.0
        %1018 = vmatpush1.msra.mxu0 0.0
        %1019 = vmatprep.subr.mxu0 %v957
        %1020 = vmatpush1.msra.mxu0 %v952
        %1021 = vmatprep.subr.mxu0 %v835
        %1022 = vmatpush1.msra.mxu0 %v830
        %1023 = vmatprep.subr.mxu0 %v713
        %1024 = vmatpush1.msra.mxu0 %v708
        %1025 = vmatprep.subr.mxu0 %v591
        %1026 = vmatpush1.msra.mxu0 %v586
        %1027 = vmatprep.subr.mxu0 %v469
        %1028 = vmatpush1.msra.mxu0 %v464
        %1029 = vmatprep.subr.mxu0 %v347
        %1030 = vmatpush1.msra.mxu0 %v342
        %1031 = vmatprep.subr.mxu0 %v252
        %1032 = vmatpush1.msra.mxu0 %v251
        %1033 = vmatprep.subr.mxu0 0.0
        %1034 = vmatpush2.msra.mxu0 0.0
        %1035 = vmatprep.subr.mxu0 0.0
        %1036 = vmatpush2.msra.mxu0 0.0
        %1037 = vmatprep.subr.mxu0 0.0
        %1038 = vmatpush2.msra.mxu0 0.0
        %1039 = vmatprep.subr.mxu0 0.0
        %1040 = vmatpush2.msra.mxu0 0.0
        %1041 = vmatprep.subr.mxu0 0.0
        %1042 = vmatpush2.msra.mxu0 0.0
        %1043 = vmatprep.subr.mxu0 0.0
        %1044 = vmatpush2.msra.mxu0 0.0
        %1045 = vmatprep.subr.mxu0 0.0
        %1046 = vmatpush2.msra.mxu0 0.0
        %1047 = vmatprep.subr.mxu0 0.0
        %1048 = vmatpush2.msra.mxu0 0.0
        %1049 = vmatprep.subr.mxu0 0.0
        %1050 = vmatpush2.msra.mxu0 0.0
        %1051 = vmatprep.subr.mxu0 0.0
        %1052 = vmatpush2.msra.mxu0 0.0
        %1053 = vmatprep.subr.mxu0 0.0
        %1054 = vmatpush2.msra.mxu0 0.0
        %1055 = vmatprep.subr.mxu0 0.0
        %1056 = vmatpush2.msra.mxu0 0.0
        %1057 = vmatprep.subr.mxu0 0.0
        %1058 = vmatpush2.msra.mxu0 0.0
        %1059 = vmatprep.subr.mxu0 0.0
        %1060 = vmatpush2.msra.mxu0 0.0
        %1061 = vmatprep.subr.mxu0 0.0
        %1062 = vmatpush2.msra.mxu0 0.0
        %1063 = vmatprep.subr.mxu0 0.0
        %1064 = vmatpush2.msra.mxu0 0.0
        %1065 = vmatprep.mubr.f32.mxu0 0.0
        %1066 = vmatmul.mubr.f32.gmra.mxu0 %v999
        %v1067 = vpop.f32.mrf.mxu0
        %v1068 = vadd.f32 %v995, %v1067
        %v1069 = vpop.f32.mrf.mxu0
        %v1070 = vadd.f32 %v995, %v1069
        %1071 = vdwg.mxu0
        %1072 = vmatprep.subr.mxu0 0.0
        %1073 = vmatpush1.msra.mxu0 0.0
        %1074 = vmatprep.subr.mxu0 0.0
        %1075 = vmatpush1.msra.mxu0 0.0
        %1076 = vmatprep.subr.mxu0 0.0
        %1077 = vmatpush1.msra.mxu0 0.0
        %1078 = vmatprep.subr.mxu0 0.0
        %1079 = vmatpush1.msra.mxu0 0.0
        %1080 = vmatprep.subr.mxu0 0.0
        %1081 = vmatpush1.msra.mxu0 0.0
        %1082 = vmatprep.subr.mxu0 0.0
        %1083 = vmatpush1.msra.mxu0 0.0
        %1084 = vmatprep.subr.mxu0 0.0
        %1085 = vmatpush1.msra.mxu0 0.0
        %1086 = vmatprep.subr.mxu0 0.0
        %1087 = vmatpush1.msra.mxu0 0.0
        %1088 = vmatprep.subr.mxu0 0.0
        %1089 = vmatpush1.msra.mxu0 0.0
        %1090 = vmatprep.subr.mxu0 %v967
        %1091 = vmatpush1.msra.mxu0 %v962
        %1092 = vmatprep.subr.mxu0 %v845
        %1093 = vmatpush1.msra.mxu0 %v840
        %1094 = vmatprep.subr.mxu0 %v723
        %1095 = vmatpush1.msra.mxu0 %v718
        %1096 = vmatprep.subr.mxu0 %v601
        %1097 = vmatpush1.msra.mxu0 %v596
        %1098 = vmatprep.subr.mxu0 %v479
        %1099 = vmatpush1.msra.mxu0 %v474
        %1100 = vmatprep.subr.mxu0 %v357
        %1101 = vmatpush1.msra.mxu0 %v352
        %1102 = vmatprep.subr.mxu0 %v254
        %1103 = vmatpush1.msra.mxu0 %v253
        %1104 = vmatprep.subr.mxu0 0.0
        %1105 = vmatpush2.msra.mxu0 0.0
        %1106 = vmatprep.subr.mxu0 0.0
        %1107 = vmatpush2.msra.mxu0 0.0
        %1108 = vmatprep.subr.mxu0 0.0
        %1109 = vmatpush2.msra.mxu0 0.0
        %1110 = vmatprep.subr.mxu0 0.0
        %1111 = vmatpush2.msra.mxu0 0.0
        %1112 = vmatprep.subr.mxu0 0.0
        %1113 = vmatpush2.msra.mxu0 0.0
        %1114 = vmatprep.subr.mxu0 0.0
        %1115 = vmatpush2.msra.mxu0 0.0
        %1116 = vmatprep.subr.mxu0 0.0
        %1117 = vmatpush2.msra.mxu0 0.0
        %1118 = vmatprep.subr.mxu0 0.0
        %1119 = vmatpush2.msra.mxu0 0.0
        %1120 = vmatprep.subr.mxu0 0.0
        %1121 = vmatpush2.msra.mxu0 0.0
        %1122 = vmatprep.subr.mxu0 0.0
        %1123 = vmatpush2.msra.mxu0 0.0
        %1124 = vmatprep.subr.mxu0 0.0
        %1125 = vmatpush2.msra.mxu0 0.0
        %1126 = vmatprep.subr.mxu0 0.0
        %1127 = vmatpush2.msra.mxu0 0.0
        %1128 = vmatprep.subr.mxu0 0.0
        %1129 = vmatpush2.msra.mxu0 0.0
        %1130 = vmatprep.subr.mxu0 0.0
        %1131 = vmatpush2.msra.mxu0 0.0
        %1132 = vmatprep.subr.mxu0 0.0
        %1133 = vmatpush2.msra.mxu0 0.0
        %1134 = vmatprep.subr.mxu0 0.0
        %1135 = vmatpush2.msra.mxu0 0.0
        %1136 = vmatprep.mubr.f32.mxu0 0.0
        %1137 = vmatmul.mubr.f32.gmra.mxu0 %v999
        %v1138 = vpop.f32.mrf.mxu0
        %v1139 = vadd.f32 %v995, %v1138
        %v1140 = vpop.f32.mrf.mxu0
        %v1141 = vadd.f32 %v995, %v1140
        %1142 = vdwg.mxu0
        %1143 = vmatprep.subr.mxu0 0.0
        %1144 = vmatpush1.msra.mxu0 0.0
        %1145 = vmatprep.subr.mxu0 0.0
        %1146 = vmatpush1.msra.mxu0 0.0
        %1147 = vmatprep.subr.mxu0 0.0
        %1148 = vmatpush1.msra.mxu0 0.0
        %1149 = vmatprep.subr.mxu0 0.0
        %1150 = vmatpush1.msra.mxu0 0.0
        %1151 = vmatprep.subr.mxu0 0.0
        %1152 = vmatpush1.msra.mxu0 0.0
        %1153 = vmatprep.subr.mxu0 0.0
        %1154 = vmatpush1.msra.mxu0 0.0
        %1155 = vmatprep.subr.mxu0 0.0
        %1156 = vmatpush1.msra.mxu0 0.0
        %1157 = vmatprep.subr.mxu0 0.0
        %1158 = vmatpush1.msra.mxu0 0.0
        %1159 = vmatprep.subr.mxu0 0.0
        %1160 = vmatpush1.msra.mxu0 0.0
        %1161 = vmatprep.subr.mxu0 %v977
        %1162 = vmatpush1.msra.mxu0 %v972
        %1163 = vmatprep.subr.mxu0 %v855
        %1164 = vmatpush1.msra.mxu0 %v850
        %1165 = vmatprep.subr.mxu0 %v733
        %1166 = vmatpush1.msra.mxu0 %v728
        %1167 = vmatprep.subr.mxu0 %v611
        %1168 = vmatpush1.msra.mxu0 %v606
        %1169 = vmatprep.subr.mxu0 %v489
        %1170 = vmatpush1.msra.mxu0 %v484
        %1171 = vmatprep.subr.mxu0 %v367
        %1172 = vmatpush1.msra.mxu0 %v362
        %1173 = vmatprep.subr.mxu0 %v256
        %1174 = vmatpush1.msra.mxu0 %v255
        %1175 = vmatprep.subr.mxu0 0.0
        %1176 = vmatpush2.msra.mxu0 0.0
        %1177 = vmatprep.subr.mxu0 0.0
        %1178 = vmatpush2.msra.mxu0 0.0
        %1179 = vmatprep.subr.mxu0 0.0
        %1180 = vmatpush2.msra.mxu0 0.0
        %1181 = vmatprep.subr.mxu0 0.0
        %1182 = vmatpush2.msra.mxu0 0.0
        %1183 = vmatprep.subr.mxu0 0.0
        %1184 = vmatpush2.msra.mxu0 0.0
        %1185 = vmatprep.subr.mxu0 0.0
        %1186 = vmatpush2.msra.mxu0 0.0
        %1187 = vmatprep.subr.mxu0 0.0
        %1188 = vmatpush2.msra.mxu0 0.0
        %1189 = vmatprep.subr.mxu0 0.0
        %1190 = vmatpush2.msra.mxu0 0.0
        %1191 = vmatprep.subr.mxu0 0.0
        %1192 = vmatpush2.msra.mxu0 0.0
        %1193 = vmatprep.subr.mxu0 0.0
        %1194 = vmatpush2.msra.mxu0 0.0
        %1195 = vmatprep.subr.mxu0 0.0
        %1196 = vmatpush2.msra.mxu0 0.0
        %1197 = vmatprep.subr.mxu0 0.0
        %1198 = vmatpush2.msra.mxu0 0.0
        %1199 = vmatprep.subr.mxu0 0.0
        %1200 = vmatpush2.msra.mxu0 0.0
        %1201 = vmatprep.subr.mxu0 0.0
        %1202 = vmatpush2.msra.mxu0 0.0
        %1203 = vmatprep.subr.mxu0 0.0
        %1204 = vmatpush2.msra.mxu0 0.0
        %1205 = vmatprep.subr.mxu0 0.0
        %1206 = vmatpush2.msra.mxu0 0.0
        %1207 = vmatprep.mubr.f32.mxu0 0.0
        %1208 = vmatmul.mubr.f32.gmra.mxu0 %v999
        %v1209 = vpop.f32.mrf.mxu0
        %v1210 = vadd.f32 %v995, %v1209
        %v1211 = vpop.f32.mrf.mxu0
        %v1212 = vadd.f32 %v995, %v1211
        %1213 = vdwg.mxu0
        %1214 = vmatprep.subr.mxu0 0.0
        %1215 = vmatpush1.msra.mxu0 0.0
        %1216 = vmatprep.subr.mxu0 0.0
        %1217 = vmatpush1.msra.mxu0 0.0
        %1218 = vmatprep.subr.mxu0 0.0
        %1219 = vmatpush1.msra.mxu0 0.0
        %1220 = vmatprep.subr.mxu0 0.0
        %1221 = vmatpush1.msra.mxu0 0.0
        %1222 = vmatprep.subr.mxu0 0.0
        %1223 = vmatpush1.msra.mxu0 0.0
        %1224 = vmatprep.subr.mxu0 0.0
        %1225 = vmatpush1.msra.mxu0 0.0
        %1226 = vmatprep.subr.mxu0 0.0
        %1227 = vmatpush1.msra.mxu0 0.0
        %1228 = vmatprep.subr.mxu0 0.0
        %1229 = vmatpush1.msra.mxu0 0.0
        %1230 = vmatprep.subr.mxu0 0.0
        %1231 = vmatpush1.msra.mxu0 0.0
        %1232 = vmatprep.subr.mxu0 %v987
        %1233 = vmatpush1.msra.mxu0 %v982
        %1234 = vmatprep.subr.mxu0 %v865
        %1235 = vmatpush1.msra.mxu0 %v860
        %1236 = vmatprep.subr.mxu0 %v743
        %1237 = vmatpush1.msra.mxu0 %v738
        %1238 = vmatprep.subr.mxu0 %v621
        %1239 = vmatpush1.msra.mxu0 %v616
        %1240 = vmatprep.subr.mxu0 %v499
        %1241 = vmatpush1.msra.mxu0 %v494
        %1242 = vmatprep.subr.mxu0 %v377
        %1243 = vmatpush1.msra.mxu0 %v372
        %1244 = vmatprep.subr.mxu0 %v258
        %1245 = vmatpush1.msra.mxu0 %v257
        %1246 = vmatprep.subr.mxu0 0.0
        %1247 = vmatpush2.msra.mxu0 0.0
        %1248 = vmatprep.subr.mxu0 0.0
        %1249 = vmatpush2.msra.mxu0 0.0
        %1250 = vmatprep.subr.mxu0 0.0
        %1251 = vmatpush2.msra.mxu0 0.0
        %1252 = vmatprep.subr.mxu0 0.0
        %1253 = vmatpush2.msra.mxu0 0.0
        %1254 = vmatprep.subr.mxu0 0.0
        %1255 = vmatpush2.msra.mxu0 0.0
        %1256 = vmatprep.subr.mxu0 0.0
        %1257 = vmatpush2.msra.mxu0 0.0
        %1258 = vmatprep.subr.mxu0 0.0
        %1259 = vmatpush2.msra.mxu0 0.0
        %1260 = vmatprep.subr.mxu0 0.0
        %1261 = vmatpush2.msra.mxu0 0.0
        %1262 = vmatprep.subr.mxu0 0.0
        %1263 = vmatpush2.msra.mxu0 0.0
        %1264 = vmatprep.subr.mxu0 0.0
        %1265 = vmatpush2.msra.mxu0 0.0
        %1266 = vmatprep.subr.mxu0 0.0
        %1267 = vmatpush2.msra.mxu0 0.0
        %1268 = vmatprep.subr.mxu0 0.0
        %1269 = vmatpush2.msra.mxu0 0.0
        %1270 = vmatprep.subr.mxu0 0.0
        %1271 = vmatpush2.msra.mxu0 0.0
        %1272 = vmatprep.subr.mxu0 0.0
        %1273 = vmatpush2.msra.mxu0 0.0
        %1274 = vmatprep.subr.mxu0 0.0
        %1275 = vmatpush2.msra.mxu0 0.0
        %1276 = vmatprep.subr.mxu0 0.0
        %1277 = vmatpush2.msra.mxu0 0.0
        %1278 = vmatprep.mubr.f32.mxu0 0.0
        %1279 = vmatmul.mubr.f32.gmra.mxu0 %v999
        %v1280 = vpop.f32.mrf.mxu0
        %v1281 = vadd.f32 %v995, %v1280
        %v1282 = vpop.f32.mrf.mxu0
        %v1283 = vadd.f32 %v995, %v1282
        %1284 = vdwg.mxu0
        %1285 = vst [vmem:[%s248] sm:$0xff] %v1068
        %1286 = vst [vmem:[%s248 + $0x8] sm:$0xff] %v1070
        %1287 = vst [vmem:[%s248 + $0x10] sm:$0xff] %v1139
        %1288 = vst [vmem:[%s248 + $0x18] sm:$0xff] %v1141
        %1289 = vst [vmem:[%s248 + $0x20] sm:$0xff] %v1210
        %1290 = vst [vmem:[%s248 + $0x28] sm:$0xff] %v1212
        %1291 = vst [vmem:[%s248 + $0x30] sm:$0xff] %v1281
        %1292 = vst [vmem:[%s248 + $0x38] sm:$0xff] %v1283
        %s1293 = sand.u32 %s135, 1
        %s1294 = scalar_lea.sflag [#allocation4], %s1293
        %s1295 = sand.u32 %s135, 1
        %s1296 = smul.addr %s1295, 64
        %s1297 = scalar_lea.vmem [#allocation7], %s1296
        // Predicated region
        $region45: #{tpu_custom_call.1} parent=35 // pred_check
          %p1298 = pneg %p145
        $region46: #{tpu_custom_call.1} parent=35 // pred_check_branch
          %1300 = sbr.rel (%p1298) target = $region48
        $region47: #{tpu_custom_call.1} parent=35 // pred_region
          %s1301 = smul.u32 8, %s27
          %s1303 = ssub.s32 1024, 1024
          %1304 = vsyncadd %s1294, %s1303
          %s1305 = smul.addr %s26, 8
          %s1306 = sadd.s32 %s1301, %s1305
          %s1307 = smul.addr %s1306, 128
          %s1308 = scalar_lea.hbm %s4, %s1307
          %s1310 = sshll.u32 %s1297, 4
          %s1311 = int_to_ptr.vmem [resolvable:$true] %s1310
          %1313 = dma.vmem_to_hbm [thread:$0]  %s1311, 1024, %s1308, %s1294
        $region48: #{tpu_custom_call.1} parent=35 // pred_fallthru
          _
      $region36: #{tpu_custom_call.1} parent=5 // pred_fallthru
        _
      %p1314 = scmp.le.s32.totalorder 2, %s17
      // Predicated region
      $region49: #{tpu_custom_call.1} parent=5 // pred_check
        %p1315 = pneg %p1314
      $region50: #{tpu_custom_call.1} parent=5 // pred_check_branch
        %1317 = sbr.rel (%p1315) target = $region52
      $region51: #{tpu_custom_call.1} parent=5 // pred_region
        %s1318 = ssub.s32 %s17, 2
        // Predicated region
        $region53: #{tpu_custom_call.1} parent=51 // pred_check
          %p1319 = pneg %p151
        $region54: #{tpu_custom_call.1} parent=51 // pred_check_branch
          %1321 = sbr.rel (%p1319) target = $region56
        $region55: #{tpu_custom_call.1} parent=51 // pred_region
          %s1322 = sand.u32 %s136, 1
          %s1323 = scalar_lea.sflag [#allocation4], %s1322
          %s1324 = sand.u32 %s136, 1
          %s1325 = smul.addr %s1324, 64
          %s1326 = scalar_lea.vmem [#allocation7], %s1325
          %1327 = dma.done %s1323, 1024
        $region56: #{tpu_custom_call.1} parent=51 // pred_fallthru
          _
      $region52: #{tpu_custom_call.1} parent=5 // pred_fallthru
        _
    $region6: #{tpu_custom_call.1} parent=1 // loop_footer
      %s21 = sadd.s32 1, %s17
    $region7: #{tpu_custom_call.1} parent=1 // loop_footer_branch
      %16 = sbr.rel target = $region3
    $region8: #{tpu_custom_call.1} parent=1 // loop_exit
      _
    %1328 = vsyncpa [#allocation3], 1
    %s1329 = scalar_lea.sflag [#allocation3], 1
    %1330 = vsyncpa %s1329, 1
    %1331 = vsyncpa [#allocation6], 1
    %1332 = vsyncpa [#allocation4], 1
    %s1333 = scalar_lea.sflag [#allocation4], 1
    %1334 = vsyncpa %s1333, 1

</llo_original>
